<compile_context>
chip_gen: v7x
topology: tpu7x:2x2x1
jax: 0.10.0
libtpu: 0.0.40
codegen_flags: <defaults>
</compile_context>

<pallas_src>
import jax
import jax.numpy as jnp
from jax.experimental import pallas as pl
from jax.experimental.pallas import tpu as pltpu

BN_EPS = 1e-5
BN_SCALE = 1.0 / (1.0 + BN_EPS) ** 0.5   # eval-mode BatchNorm1d with default stats
_LANE = 128


# ---------------------------------------------------------------------------
# small in-kernel math helpers (VPU/EUP/XLU ops)
# ---------------------------------------------------------------------------
def _softplus(x):
    # numerically stable softplus: max(x,0) + log(1 + exp(-|x|))
    return jnp.maximum(x, 0.0) + jnp.log(1.0 + jnp.exp(-jnp.abs(x)))


def _softmax(x, axis):
    m = jnp.max(x, axis=axis, keepdims=True)
    e = jnp.exp(x - m)
    return e * pl.reciprocal(jnp.sum(e, axis=axis, keepdims=True), approx=True)


def _sigmoid(x):
    return pl.reciprocal(1.0 + jnp.exp(-x), approx=True)


def _elu(x):
    # F.elu, alpha=1 ; clamp arg of exp to avoid inf in the unselected branch
    return jnp.where(x > 0.0, x, jnp.exp(jnp.minimum(x, 0.0)) - 1.0)


# ---------------------------------------------------------------------------
# fused TESAN kernel: one batch tile (TB examples) per grid step
# ---------------------------------------------------------------------------
def tesan_fused_kernel(
        x_ref, eps_ref, wv_ref, mask_ref, pos_ref,
        w1_ref, b1_ref, w2_ref, b2_ref,
        wm_ref, bm_ref, wl_ref, bl_ref,
        wt_ref, ww_ref, bw_ref,
        wx_ref, bx_ref, wa_ref, ba_ref, ua_ref, bua_ref,
        wc_ref, bc_ref, v_ref, bv_ref,
        wg_ref, bg_ref, ug_ref, bug_ref, wcls_ref, bcls_ref,
        out_ref):
    f32 = jnp.float32

    # ---------------- NTM ----------------
    x = x_ref[...]                                                     # (TB, V)
    en1 = _softplus(jnp.dot(x, w1_ref[...], preferred_element_type=f32) + b1_ref[...])
    en2 = _softplus(jnp.dot(en1, w2_ref[...], preferred_element_type=f32) + b2_ref[...])
    # en2_drop / p_drop: identity (eval)
    post_mean = (jnp.dot(en2, wm_ref[...], preferred_element_type=f32)
                 + bm_ref[...]) * BN_SCALE
    post_logvar = (jnp.dot(en2, wl_ref[...], preferred_element_type=f32)
                   + bl_ref[...]) * BN_SCALE
    # std = exp(0.5*logvar)  (== sqrt(exp(logvar)), wider safe range, one EUP op)
    z = post_mean + jnp.exp(0.5 * post_logvar) * eps_ref[...]          # (TB, T)
    p = _softmax(z, axis=1)
    dt = jnp.tanh(jnp.dot(p, wt_ref[...], preferred_element_type=f32))  # (TB, H)
    recon = _softmax(
        (jnp.dot(dt, ww_ref[...], preferred_element_type=f32) + bw_ref[...]) * BN_SCALE,
        axis=1)                                                        # (TB, V)

    # ---------------- TESA / SAN ----------------
    TB, L, D = wv_ref.shape
    H = wx_ref.shape[1]
    xseq = wv_ref[...] + pos_ref[...][None, :, :]                      # (TB, L, D)

    # batched projections: one (TB*L, D) @ (D, H) matmul each
    x2 = xseq.reshape(TB * L, D)
    h2 = jnp.tanh(jnp.dot(x2, wx_ref[...], preferred_element_type=f32) + bx_ref[...])
    ap2 = jnp.dot(h2, wa_ref[...], preferred_element_type=f32) + ba_ref[...]
    up2 = jnp.dot(h2, ua_ref[...], preferred_element_type=f32) + bua_ref[...]
    h = h2.reshape(TB, L, H)
    ap = ap2.reshape(TB, L, H)
    up = up2.reshape(TB, L, H)

    m = mask_ref[...]                                                  # (TB, L, 1)
    # TODO(synk): for production L/H, tile the query axis so the (TB,L,L,H)
    # pairwise tensor fits v7x's 64 MiB VMEM; at the toy L=8 it is ~8 KiB.
    temp = _elu(ap[:, :, None, :] + up[:, None, :, :])                 # (TB, L, L, H)
    attn = _softmax(temp + m[:, None, :, :], axis=2)                   # softmax over keys
    c = jnp.sum(attn * h[:, None, :, :], axis=2)                       # (TB, L, H)

    # TESA doc-level attention
    tc = jnp.tanh(jnp.dot(c.reshape(TB * L, H), wc_ref[...],
                          preferred_element_type=f32) + bc_ref[...]).reshape(TB, L, H)
    dtv = jnp.tanh(jnp.dot(dt, v_ref[...], preferred_element_type=f32) + bv_ref[...])
    s = jnp.sum(tc * dtv[:, None, :], axis=2, keepdims=True) + m       # (TB, L, 1)
    a_doc = _softmax(s, axis=1)
    doc = jnp.sum(a_doc * c, axis=1)                                   # (TB, H)

    # ---------------- gated fusion + classifier ----------------
    gate = _sigmoid(jnp.dot(doc, wg_ref[...], preferred_element_type=f32) + bg_ref[...]
                    + jnp.dot(dt, ug_ref[...], preferred_element_type=f32) + bug_ref[...])
    fea = gate * doc + (1.0 - gate) * dt                               # f_drop: identity
    logits = jnp.dot(fea, wcls_ref[...], preferred_element_type=f32) + bcls_ref[...]
    zc = logits - jnp.max(logits, axis=1, keepdims=True)
    logp = zc - jnp.log(jnp.sum(jnp.exp(zc), axis=1, keepdims=True))   # (TB, C)

    # ---------------- lane-dense packed store: [ recon | logp | 0-pad ] ----
    V = recon.shape[1]
    C = logp.shape[1]
    out_ref[...] = jnp.zeros_like(out_ref)
    out_ref[:, 0:V] = recon
    out_ref[:, V:V + C] = logp


# ---------------------------------------------------------------------------
# wrapper
# ---------------------------------------------------------------------------
def tesan_forward(params, x, word_vecs, mask, eps):
    B, V = x.shape
    _, L, D = word_vecs.shape
    T = eps.shape[1]
    C = params["Wcls"].shape[1]

    # Batch tile: fill the 8 sublanes when possible; keep a parallel grid axis
    # so v7x's two TensorCores both get work at larger batch sizes.
    TB = 8 if (B % 8 == 0) else B
    nb = B // TB

    pos_vecs = params["pos_emb"][:L]                                   # (L, D)
    slab_w = max(_LANE, ((V + C + _LANE - 1) // _LANE) * _LANE)

    def _const(nd):
        zeros = (0,) * nd
        return lambda i: zeros

    weight_order = ["W1", "b1", "W2", "b2", "Wm", "bm", "Wl", "bl", "Wt", "Ww", "bw",
                    "Wx", "bx", "Wa", "ba", "Ua", "bua", "Wc", "bc", "Vw", "bv",
                    "Wg", "bg", "Ug", "bug", "Wcls", "bcls"]
    weights = [params[k] for k in weight_order]

    in_specs = [
        pl.BlockSpec((TB, V), lambda i: (i, 0)),           # x
        pl.BlockSpec((TB, T), lambda i: (i, 0)),           # eps
        pl.BlockSpec((TB, L, D), lambda i: (i, 0, 0)),     # word_vecs
        pl.BlockSpec((TB, L, 1), lambda i: (i, 0, 0)),     # mask (key/sublane-major)
        pl.BlockSpec((L, D), _const(2)),                   # positional embeddings
    ] + [pl.BlockSpec(w.shape, _const(w.ndim)) for w in weights]

    # TODO(synk): for production vocab sizes, tile W1/Ww over V and raise
    # vmem_limit_bytes; at these shapes everything trivially fits VMEM.
    slab = pl.pallas_call(
        tesan_fused_kernel,
        grid=(nb,),
        in_specs=in_specs,
        out_specs=pl.BlockSpec((TB, slab_w), lambda i: (i, 0)),
        out_shape=jax.ShapeDtypeStruct((B, slab_w), jnp.float32),
        compiler_params=pltpu.CompilerParams(dimension_semantics=("parallel",)),
    )(x, eps, word_vecs, mask, pos_vecs, *weights)

    recon = slab[:, :V]
    out = slab[:, V:V + C]
    return recon, out


# ---------------------------------------------------------------------------
# pure-JAX reference (same eval-mode semantics) for a sanity check
# ---------------------------------------------------------------------------
def tesan_reference(params, x, word_vecs, mask, eps):
    en1 = jax.nn.softplus(x @ params["W1"] + params["b1"])
    en2 = jax.nn.softplus(en1 @ params["W2"] + params["b2"])
    pm = (en2 @ params["Wm"] + params["bm"]) * BN_SCALE
    plv = (en2 @ params["Wl"] + params["bl"]) * BN_SCALE
    z = pm + jnp.exp(0.5 * plv) * eps
    p = jax.nn.softmax(z, axis=1)
    dt = jnp.tanh(p @ params["Wt"])
    recon = jax.nn.softmax((dt @ params["Ww"] + params["bw"]) * BN_SCALE, axis=1)

    L = word_vecs.shape[1]
    xseq = word_vecs + params["pos_emb"][:L][None]
    h = jnp.tanh(xseq @ params["Wx"] + params["bx"])
    ap = h @ params["Wa"] + params["ba"]
    up = h @ params["Ua"] + params["bua"]
    temp = jax.nn.elu(ap[:, :, None, :] + up[:, None, :, :])
    attn = jax.nn.softmax(temp + mask[:, None, :, :], axis=2)
    c = jnp.sum(attn * h[:, None, :, :], axis=2)
    tc = jnp.tanh(c @ params["Wc"] + params["bc"])
    dtv = jnp.tanh(dt @ params["Vw"] + params["bv"])
    s = jnp.sum(tc * dtv[:, None, :], axis=2, keepdims=True) + mask
    a_doc = jax.nn.softmax(s, axis=1)
    doc = jnp.sum(a_doc * c, axis=1)

    gate = jax.nn.sigmoid(doc @ params["Wg"] + params["bg"]
                          + dt @ params["Ug"] + params["bug"])
    fea = gate * doc + (1.0 - gate) * dt
    logits = fea @ params["Wcls"] + params["bcls"]
    return recon, jax.nn.log_softmax(logits, axis=1)


# ---------------------------------------------------------------------------
# deterministic parameter init (xavier-normal weights, zero biases)
# ---------------------------------------------------------------------------
def _xavier(key, fan_in, fan_out, shape=None):
    std = (2.0 / (fan_in + fan_out)) ** 0.5
    if shape is None:
        shape = (fan_in, fan_out)
    return (std * jax.random.normal(key, shape)).astype(jnp.float32)


def init_params(key, V, EN1, EN2, T, H, D, C, max_pos=20):
    ks = jax.random.split(key, 16)
    z = lambda n: jnp.zeros((1, n), jnp.float32)
    return {
        # NTM
        "W1": _xavier(ks[0], V, EN1), "b1": z(EN1),
        "W2": _xavier(ks[1], EN1, EN2), "b2": z(EN2),
        "Wm": _xavier(ks[2], EN2, T), "bm": z(T),
        "Wl": _xavier(ks[3], EN2, T), "bl": z(T),
        "Wt": _xavier(ks[4], T, H),                       # topic_emb (no bias)
        "Ww": _xavier(ks[5], H, V), "bw": z(V),           # word_emb
        # TESA / SAN
        "pos_emb": _xavier(ks[6], max_pos, D, shape=(max_pos, D)),
        "Wx": _xavier(ks[7], D, H), "bx": z(H),
        "Wa": _xavier(ks[8], H, H), "ba": z(H),
        "Ua": _xavier(ks[9], H, H), "bua": z(H),
        "Wc": _xavier(ks[10], H, H), "bc": z(H),
        "Vw": _xavier(ks[11], H, H), "bv": z(H),
        # head
        "Wg": _xavier(ks[12], H, H), "bg": z(H),
        "Ug": _xavier(ks[13], H, H), "bug": z(H),
        "Wcls": _xavier(ks[14], H, C), "bcls": z(C),
    }


if __name__ == "__main__":
    # net_arch: num_input=32, en1=32, en2=32, num_topic=16, h_dim=32,
    #           in_dim=32, num_class=8 ; B=2, L=8 (<= 20 positions)
    B, V, EN1, EN2, T, H, D, C, L = 2, 32, 32, 32, 16, 32, 32, 8, 8

    key = jax.random.PRNGKey(0)
    k_param, k_x, k_wv, k_eps = jax.random.split(key, 4)

    params = init_params(k_param, V, EN1, EN2, T, H, D, C)

    x = jax.random.uniform(k_x, (B, V), dtype=jnp.float32)          # bag-of-words
    word_vecs = jax.random.normal(k_wv, (B, L, D), dtype=jnp.float32)
    mask = jnp.zeros((B, L, 1), jnp.float32)
    mask = mask.at[1, L - 2:, :].set(-1e9)                          # pad last 2 of ex.1
    eps = jax.random.normal(k_eps, (B, T), dtype=jnp.float32)       # reparam noise

    recon, out = jax.jit(tesan_forward)(params, x, word_vecs, mask, eps)
    jax.block_until_ready((recon, out))

    assert recon.shape == (B, V) and out.shape == (B, C)
    assert bool(jnp.all(jnp.isfinite(recon))) and bool(jnp.all(jnp.isfinite(out)))

    # loose tolerance: kernel uses EUP approximate reciprocals in the softmaxes
    recon_r, out_r = tesan_reference(params, x, word_vecs, mask, eps)
    assert bool(jnp.allclose(recon, recon_r, atol=5e-2, rtol=5e-2))
    assert bool(jnp.allclose(out, out_r, atol=5e-2, rtol=5e-2))

    print("KERNEL_OK")
</pallas_src>

<mosaic_0001>
module attributes {stable_mosaic.version = 11 : i64} {
  func.func @tesan_fused_kernel(%arg0: i32, %arg1: memref<2x32xf32, #tpu.memory_space<vmem>>, %arg2: memref<2x16xf32, #tpu.memory_space<vmem>>, %arg3: memref<2x8x32xf32, #tpu.memory_space<vmem>>, %arg4: memref<2x8x1xf32, #tpu.memory_space<vmem>>, %arg5: memref<8x32xf32, #tpu.memory_space<vmem>>, %arg6: memref<32x32xf32, #tpu.memory_space<vmem>>, %arg7: memref<1x32xf32, #tpu.memory_space<vmem>>, %arg8: memref<32x32xf32, #tpu.memory_space<vmem>>, %arg9: memref<1x32xf32, #tpu.memory_space<vmem>>, %arg10: memref<32x16xf32, #tpu.memory_space<vmem>>, %arg11: memref<1x16xf32, #tpu.memory_space<vmem>>, %arg12: memref<32x16xf32, #tpu.memory_space<vmem>>, %arg13: memref<1x16xf32, #tpu.memory_space<vmem>>, %arg14: memref<16x32xf32, #tpu.memory_space<vmem>>, %arg15: memref<32x32xf32, #tpu.memory_space<vmem>>, %arg16: memref<1x32xf32, #tpu.memory_space<vmem>>, %arg17: memref<32x32xf32, #tpu.memory_space<vmem>>, %arg18: memref<1x32xf32, #tpu.memory_space<vmem>>, %arg19: memref<32x32xf32, #tpu.memory_space<vmem>>, %arg20: memref<1x32xf32, #tpu.memory_space<vmem>>, %arg21: memref<32x32xf32, #tpu.memory_space<vmem>>, %arg22: memref<1x32xf32, #tpu.memory_space<vmem>>, %arg23: memref<32x32xf32, #tpu.memory_space<vmem>>, %arg24: memref<1x32xf32, #tpu.memory_space<vmem>>, %arg25: memref<32x32xf32, #tpu.memory_space<vmem>>, %arg26: memref<1x32xf32, #tpu.memory_space<vmem>>, %arg27: memref<32x32xf32, #tpu.memory_space<vmem>>, %arg28: memref<1x32xf32, #tpu.memory_space<vmem>>, %arg29: memref<32x32xf32, #tpu.memory_space<vmem>>, %arg30: memref<1x32xf32, #tpu.memory_space<vmem>>, %arg31: memref<32x8xf32, #tpu.memory_space<vmem>>, %arg32: memref<1x8xf32, #tpu.memory_space<vmem>>, %arg33: memref<2x128xf32, #tpu.memory_space<vmem>>) attributes {dimension_semantics = [#tpu.dimension_semantics<parallel>], iteration_bounds = array<i64: 1>, scalar_prefetch = 0 : i64, scratch_operands = 0 : i64, tpu.core_type = #tpu.core_type<tc>, window_params = [{transform_indices = @transform_0, window_bounds = array<i64: 2, 32>}, {transform_indices = @transform_1, window_bounds = array<i64: 2, 16>}, {transform_indices = @transform_2, window_bounds = array<i64: 2, 8, 32>}, {transform_indices = @transform_3, window_bounds = array<i64: 2, 8, 1>}, {pipeline_mode = #tpu.pipeline_mode<synchronous>, transform_indices = @transform_4, window_bounds = array<i64: 8, 32>}, {pipeline_mode = #tpu.pipeline_mode<synchronous>, transform_indices = @transform_5, window_bounds = array<i64: 32, 32>}, {pipeline_mode = #tpu.pipeline_mode<synchronous>, transform_indices = @transform_6, window_bounds = array<i64: 1, 32>}, {pipeline_mode = #tpu.pipeline_mode<synchronous>, transform_indices = @transform_7, window_bounds = array<i64: 32, 32>}, {pipeline_mode = #tpu.pipeline_mode<synchronous>, transform_indices = @transform_8, window_bounds = array<i64: 1, 32>}, {pipeline_mode = #tpu.pipeline_mode<synchronous>, transform_indices = @transform_9, window_bounds = array<i64: 32, 16>}, {pipeline_mode = #tpu.pipeline_mode<synchronous>, transform_indices = @transform_10, window_bounds = array<i64: 1, 16>}, {pipeline_mode = #tpu.pipeline_mode<synchronous>, transform_indices = @transform_11, window_bounds = array<i64: 32, 16>}, {pipeline_mode = #tpu.pipeline_mode<synchronous>, transform_indices = @transform_12, window_bounds = array<i64: 1, 16>}, {pipeline_mode = #tpu.pipeline_mode<synchronous>, transform_indices = @transform_13, window_bounds = array<i64: 16, 32>}, {pipeline_mode = #tpu.pipeline_mode<synchronous>, transform_indices = @transform_14, window_bounds = array<i64: 32, 32>}, {pipeline_mode = #tpu.pipeline_mode<synchronous>, transform_indices = @transform_15, window_bounds = array<i64: 1, 32>}, {pipeline_mode = #tpu.pipeline_mode<synchronous>, transform_indices = @transform_16, window_bounds = array<i64: 32, 32>}, {pipeline_mode = #tpu.pipeline_mode<synchronous>, transform_indices = @transform_17, window_bounds = array<i64: 1, 32>}, {pipeline_mode = #tpu.pipeline_mode<synchronous>, transform_indices = @transform_18, window_bounds = array<i64: 32, 32>}, {pipeline_mode = #tpu.pipeline_mode<synchronous>, transform_indices = @transform_19, window_bounds = array<i64: 1, 32>}, {pipeline_mode = #tpu.pipeline_mode<synchronous>, transform_indices = @transform_20, window_bounds = array<i64: 32, 32>}, {pipeline_mode = #tpu.pipeline_mode<synchronous>, transform_indices = @transform_21, window_bounds = array<i64: 1, 32>}, {pipeline_mode = #tpu.pipeline_mode<synchronous>, transform_indices = @transform_22, window_bounds = array<i64: 32, 32>}, {pipeline_mode = #tpu.pipeline_mode<synchronous>, transform_indices = @transform_23, window_bounds = array<i64: 1, 32>}, {pipeline_mode = #tpu.pipeline_mode<synchronous>, transform_indices = @transform_24, window_bounds = array<i64: 32, 32>}, {pipeline_mode = #tpu.pipeline_mode<synchronous>, transform_indices = @transform_25, window_bounds = array<i64: 1, 32>}, {pipeline_mode = #tpu.pipeline_mode<synchronous>, transform_indices = @transform_26, window_bounds = array<i64: 32, 32>}, {pipeline_mode = #tpu.pipeline_mode<synchronous>, transform_indices = @transform_27, window_bounds = array<i64: 1, 32>}, {pipeline_mode = #tpu.pipeline_mode<synchronous>, transform_indices = @transform_28, window_bounds = array<i64: 32, 32>}, {pipeline_mode = #tpu.pipeline_mode<synchronous>, transform_indices = @transform_29, window_bounds = array<i64: 1, 32>}, {pipeline_mode = #tpu.pipeline_mode<synchronous>, transform_indices = @transform_30, window_bounds = array<i64: 32, 8>}, {pipeline_mode = #tpu.pipeline_mode<synchronous>, transform_indices = @transform_31, window_bounds = array<i64: 1, 8>}, {transform_indices = @transform_32, window_bounds = array<i64: 2, 128>}]} {
    %c0 = arith.constant 0 : index
    %c0_0 = arith.constant 0 : index
    %0 = vector.load %arg1[%c0, %c0_0] : memref<2x32xf32, #tpu.memory_space<vmem>>, vector<2x32xf32>
    %c0_1 = arith.constant 0 : index
    %c0_2 = arith.constant 0 : index
    %1 = vector.load %arg6[%c0_1, %c0_2] : memref<32x32xf32, #tpu.memory_space<vmem>>, vector<32x32xf32>
    %cst = arith.constant dense<0.000000e+00> : vector<2x32xf32>
    %2 = tpu.matmul %0, %1, %cst {dimension_numbers = #tpu.dot_dimension_numbers<[1], [0], [0], [1], [0, 0, 1, 1], [], []>} : vector<2x32xf32>, vector<32x32xf32>, vector<2x32xf32> -> vector<2x32xf32>
    %c0_3 = arith.constant 0 : index
    %c0_4 = arith.constant 0 : index
    %3 = vector.load %arg7[%c0_3, %c0_4] : memref<1x32xf32, #tpu.memory_space<vmem>>, vector<1x32xf32>
    %4 = vector.broadcast %3 : vector<1x32xf32> to vector<2x32xf32>
    %5 = arith.addf %2, %4 : vector<2x32xf32>
    %cst_5 = arith.constant 0.000000e+00 : f32
    %6 = vector.broadcast %cst_5 : f32 to vector<2x32xf32>
    %7 = arith.maximumf %5, %6 : vector<2x32xf32>
    %8 = math.absf %5 : vector<2x32xf32>
    %cst_6 = arith.constant 0.000000e+00 : f32
    %9 = vector.broadcast %cst_6 : f32 to vector<2x32xf32>
    %10 = arith.subf %9, %8 : vector<2x32xf32>
    %11 = math.exp %10 : vector<2x32xf32>
    %cst_7 = arith.constant 1.000000e+00 : f32
    %12 = vector.broadcast %cst_7 : f32 to vector<2x32xf32>
    %13 = arith.addf %12, %11 : vector<2x32xf32>
    %14 = math.log %13 : vector<2x32xf32>
    %15 = arith.addf %7, %14 : vector<2x32xf32>
    %c0_8 = arith.constant 0 : index
    %c0_9 = arith.constant 0 : index
    %16 = vector.load %arg8[%c0_8, %c0_9] : memref<32x32xf32, #tpu.memory_space<vmem>>, vector<32x32xf32>
    %cst_10 = arith.constant dense<0.000000e+00> : vector<2x32xf32>
    %17 = tpu.matmul %15, %16, %cst_10 {dimension_numbers = #tpu.dot_dimension_numbers<[1], [0], [0], [1], [0, 0, 1, 1], [], []>} : vector<2x32xf32>, vector<32x32xf32>, vector<2x32xf32> -> vector<2x32xf32>
    %c0_11 = arith.constant 0 : index
    %c0_12 = arith.constant 0 : index
    %18 = vector.load %arg9[%c0_11, %c0_12] : memref<1x32xf32, #tpu.memory_space<vmem>>, vector<1x32xf32>
    %19 = vector.broadcast %18 : vector<1x32xf32> to vector<2x32xf32>
    %20 = arith.addf %17, %19 : vector<2x32xf32>
    %cst_13 = arith.constant 0.000000e+00 : f32
    %21 = vector.broadcast %cst_13 : f32 to vector<2x32xf32>
    %22 = arith.maximumf %20, %21 : vector<2x32xf32>
    %23 = math.absf %20 : vector<2x32xf32>
    %cst_14 = arith.constant 0.000000e+00 : f32
    %24 = vector.broadcast %cst_14 : f32 to vector<2x32xf32>
    %25 = arith.subf %24, %23 : vector<2x32xf32>
    %26 = math.exp %25 : vector<2x32xf32>
    %cst_15 = arith.constant 1.000000e+00 : f32
    %27 = vector.broadcast %cst_15 : f32 to vector<2x32xf32>
    %28 = arith.addf %27, %26 : vector<2x32xf32>
    %29 = math.log %28 : vector<2x32xf32>
    %30 = arith.addf %22, %29 : vector<2x32xf32>
    %c0_16 = arith.constant 0 : index
    %c0_17 = arith.constant 0 : index
    %31 = vector.load %arg10[%c0_16, %c0_17] : memref<32x16xf32, #tpu.memory_space<vmem>>, vector<32x16xf32>
    %cst_18 = arith.constant dense<0.000000e+00> : vector<2x16xf32>
    %32 = tpu.matmul %30, %31, %cst_18 {dimension_numbers = #tpu.dot_dimension_numbers<[1], [0], [0], [1], [0, 0, 1, 1], [], []>} : vector<2x32xf32>, vector<32x16xf32>, vector<2x16xf32> -> vector<2x16xf32>
    %c0_19 = arith.constant 0 : index
    %c0_20 = arith.constant 0 : index
    %33 = vector.load %arg11[%c0_19, %c0_20] : memref<1x16xf32, #tpu.memory_space<vmem>>, vector<1x16xf32>
    %34 = vector.broadcast %33 : vector<1x16xf32> to vector<2x16xf32>
    %35 = arith.addf %32, %34 : vector<2x16xf32>
    %cst_21 = arith.constant 0.999994993 : f32
    %36 = vector.broadcast %cst_21 : f32 to vector<2x16xf32>
    %37 = arith.mulf %35, %36 : vector<2x16xf32>
    %c0_22 = arith.constant 0 : index
    %c0_23 = arith.constant 0 : index
    %38 = vector.load %arg12[%c0_22, %c0_23] : memref<32x16xf32, #tpu.memory_space<vmem>>, vector<32x16xf32>
    %cst_24 = arith.constant dense<0.000000e+00> : vector<2x16xf32>
    %39 = tpu.matmul %30, %38, %cst_24 {dimension_numbers = #tpu.dot_dimension_numbers<[1], [0], [0], [1], [0, 0, 1, 1], [], []>} : vector<2x32xf32>, vector<32x16xf32>, vector<2x16xf32> -> vector<2x16xf32>
    %c0_25 = arith.constant 0 : index
    %c0_26 = arith.constant 0 : index
    %40 = vector.load %arg13[%c0_25, %c0_26] : memref<1x16xf32, #tpu.memory_space<vmem>>, vector<1x16xf32>
    %41 = vector.broadcast %40 : vector<1x16xf32> to vector<2x16xf32>
    %42 = arith.addf %39, %41 : vector<2x16xf32>
    %cst_27 = arith.constant 0.999994993 : f32
    %43 = vector.broadcast %cst_27 : f32 to vector<2x16xf32>
    %44 = arith.mulf %42, %43 : vector<2x16xf32>
    %cst_28 = arith.constant 5.000000e-01 : f32
    %45 = vector.broadcast %cst_28 : f32 to vector<2x16xf32>
    %46 = arith.mulf %45, %44 : vector<2x16xf32>
    %47 = math.exp %46 : vector<2x16xf32>
    %c0_29 = arith.constant 0 : index
    %c0_30 = arith.constant 0 : index
    %48 = vector.load %arg2[%c0_29, %c0_30] : memref<2x16xf32, #tpu.memory_space<vmem>>, vector<2x16xf32>
    %49 = arith.mulf %47, %48 : vector<2x16xf32>
    %50 = arith.addf %37, %49 : vector<2x16xf32>
    %cst_31 = arith.constant dense<0xFF800000> : vector<2xf32>
    %51 = vector.multi_reduction <maximumf>, %50, %cst_31 [1] : vector<2x16xf32> to vector<2xf32>
    %52 = vector.shape_cast %51 : vector<2xf32> to vector<2x1xf32>
    %53 = vector.broadcast %52 : vector<2x1xf32> to vector<2x16xf32>
    %54 = arith.subf %50, %53 : vector<2x16xf32>
    %55 = math.exp %54 : vector<2x16xf32>
    %cst_32 = arith.constant dense<0.000000e+00> : vector<2xf32>
    %56 = vector.multi_reduction <add>, %55, %cst_32 [1] : vector<2x16xf32> to vector<2xf32>
    %57 = vector.shape_cast %56 : vector<2xf32> to vector<2x1xf32>
    %58 = tpu.reciprocal %57 {approx = true} : vector<2x1xf32> -> vector<2x1xf32>
    %59 = vector.broadcast %58 : vector<2x1xf32> to vector<2x16xf32>
    %60 = arith.mulf %55, %59 : vector<2x16xf32>
    %c0_33 = arith.constant 0 : index
    %c0_34 = arith.constant 0 : index
    %61 = vector.load %arg14[%c0_33, %c0_34] : memref<16x32xf32, #tpu.memory_space<vmem>>, vector<16x32xf32>
    %cst_35 = arith.constant dense<0.000000e+00> : vector<2x32xf32>
    %62 = tpu.matmul %60, %61, %cst_35 {dimension_numbers = #tpu.dot_dimension_numbers<[1], [0], [0], [1], [0, 0, 1, 1], [], []>} : vector<2x16xf32>, vector<16x32xf32>, vector<2x32xf32> -> vector<2x32xf32>
    %63 = math.tanh %62 : vector<2x32xf32>
    %c0_36 = arith.constant 0 : index
    %c0_37 = arith.constant 0 : index
    %64 = vector.load %arg15[%c0_36, %c0_37] : memref<32x32xf32, #tpu.memory_space<vmem>>, vector<32x32xf32>
    %cst_38 = arith.constant dense<0.000000e+00> : vector<2x32xf32>
    %65 = tpu.matmul %63, %64, %cst_38 {dimension_numbers = #tpu.dot_dimension_numbers<[1], [0], [0], [1], [0, 0, 1, 1], [], []>} : vector<2x32xf32>, vector<32x32xf32>, vector<2x32xf32> -> vector<2x32xf32>
    %c0_39 = arith.constant 0 : index
    %c0_40 = arith.constant 0 : index
    %66 = vector.load %arg16[%c0_39, %c0_40] : memref<1x32xf32, #tpu.memory_space<vmem>>, vector<1x32xf32>
    %67 = vector.broadcast %66 : vector<1x32xf32> to vector<2x32xf32>
    %68 = arith.addf %65, %67 : vector<2x32xf32>
    %cst_41 = arith.constant 0.999994993 : f32
    %69 = vector.broadcast %cst_41 : f32 to vector<2x32xf32>
    %70 = arith.mulf %68, %69 : vector<2x32xf32>
    %cst_42 = arith.constant dense<0xFF800000> : vector<2xf32>
    %71 = vector.multi_reduction <maximumf>, %70, %cst_42 [1] : vector<2x32xf32> to vector<2xf32>
    %72 = vector.shape_cast %71 : vector<2xf32> to vector<2x1xf32>
    %73 = vector.broadcast %72 : vector<2x1xf32> to vector<2x32xf32>
    %74 = arith.subf %70, %73 : vector<2x32xf32>
    %75 = math.exp %74 : vector<2x32xf32>
    %cst_43 = arith.constant dense<0.000000e+00> : vector<2xf32>
    %76 = vector.multi_reduction <add>, %75, %cst_43 [1] : vector<2x32xf32> to vector<2xf32>
    %77 = vector.shape_cast %76 : vector<2xf32> to vector<2x1xf32>
    %78 = tpu.reciprocal %77 {approx = true} : vector<2x1xf32> -> vector<2x1xf32>
    %79 = vector.broadcast %78 : vector<2x1xf32> to vector<2x32xf32>
    %80 = arith.mulf %75, %79 : vector<2x32xf32>
    %c0_44 = arith.constant 0 : index
    %c0_45 = arith.constant 0 : index
    %c0_46 = arith.constant 0 : index
    %81 = vector.load %arg3[%c0_44, %c0_45, %c0_46] : memref<2x8x32xf32, #tpu.memory_space<vmem>>, vector<2x8x32xf32>
    %c0_47 = arith.constant 0 : index
    %c0_48 = arith.constant 0 : index
    %82 = vector.load %arg5[%c0_47, %c0_48] : memref<8x32xf32, #tpu.memory_space<vmem>>, vector<8x32xf32>
    %83 = vector.shape_cast %82 : vector<8x32xf32> to vector<1x8x32xf32>
    %84 = vector.broadcast %83 : vector<1x8x32xf32> to vector<2x8x32xf32>
    %85 = arith.addf %81, %84 : vector<2x8x32xf32>
    %86 = vector.shape_cast %85 : vector<2x8x32xf32> to vector<16x32xf32>
    %c0_49 = arith.constant 0 : index
    %c0_50 = arith.constant 0 : index
    %87 = vector.load %arg17[%c0_49, %c0_50] : memref<32x32xf32, #tpu.memory_space<vmem>>, vector<32x32xf32>
    %cst_51 = arith.constant dense<0.000000e+00> : vector<16x32xf32>
    %88 = tpu.matmul %86, %87, %cst_51 {dimension_numbers = #tpu.dot_dimension_numbers<[1], [0], [0], [1], [0, 0, 1, 1], [], []>} : vector<16x32xf32>, vector<32x32xf32>, vector<16x32xf32> -> vector<16x32xf32>
    %c0_52 = arith.constant 0 : index
    %c0_53 = arith.constant 0 : index
    %89 = vector.load %arg18[%c0_52, %c0_53] : memref<1x32xf32, #tpu.memory_space<vmem>>, vector<1x32xf32>
    %90 = vector.broadcast %89 : vector<1x32xf32> to vector<16x32xf32>
    %91 = arith.addf %88, %90 : vector<16x32xf32>
    %92 = math.tanh %91 : vector<16x32xf32>
    %c0_54 = arith.constant 0 : index
    %c0_55 = arith.constant 0 : index
    %93 = vector.load %arg19[%c0_54, %c0_55] : memref<32x32xf32, #tpu.memory_space<vmem>>, vector<32x32xf32>
    %cst_56 = arith.constant dense<0.000000e+00> : vector<16x32xf32>
    %94 = tpu.matmul %92, %93, %cst_56 {dimension_numbers = #tpu.dot_dimension_numbers<[1], [0], [0], [1], [0, 0, 1, 1], [], []>} : vector<16x32xf32>, vector<32x32xf32>, vector<16x32xf32> -> vector<16x32xf32>
    %c0_57 = arith.constant 0 : index
    %c0_58 = arith.constant 0 : index
    %95 = vector.load %arg20[%c0_57, %c0_58] : memref<1x32xf32, #tpu.memory_space<vmem>>, vector<1x32xf32>
    %96 = vector.broadcast %95 : vector<1x32xf32> to vector<16x32xf32>
    %97 = arith.addf %94, %96 : vector<16x32xf32>
    %c0_59 = arith.constant 0 : index
    %c0_60 = arith.constant 0 : index
    %98 = vector.load %arg21[%c0_59, %c0_60] : memref<32x32xf32, #tpu.memory_space<vmem>>, vector<32x32xf32>
    %cst_61 = arith.constant dense<0.000000e+00> : vector<16x32xf32>
    %99 = tpu.matmul %92, %98, %cst_61 {dimension_numbers = #tpu.dot_dimension_numbers<[1], [0], [0], [1], [0, 0, 1, 1], [], []>} : vector<16x32xf32>, vector<32x32xf32>, vector<16x32xf32> -> vector<16x32xf32>
    %c0_62 = arith.constant 0 : index
    %c0_63 = arith.constant 0 : index
    %100 = vector.load %arg22[%c0_62, %c0_63] : memref<1x32xf32, #tpu.memory_space<vmem>>, vector<1x32xf32>
    %101 = vector.broadcast %100 : vector<1x32xf32> to vector<16x32xf32>
    %102 = arith.addf %99, %101 : vector<16x32xf32>
    %103 = vector.shape_cast %92 : vector<16x32xf32> to vector<2x8x32xf32>
    %104 = vector.shape_cast %97 : vector<16x32xf32> to vector<2x8x32xf32>
    %105 = vector.shape_cast %102 : vector<16x32xf32> to vector<2x8x32xf32>
    %c0_64 = arith.constant 0 : index
    %c0_65 = arith.constant 0 : index
    %c0_66 = arith.constant 0 : index
    %106 = vector.load %arg4[%c0_64, %c0_65, %c0_66] : memref<2x8x1xf32, #tpu.memory_space<vmem>>, vector<2x8x1xf32>
    %107 = vector.shape_cast %104 : vector<2x8x32xf32> to vector<2x8x1x32xf32>
    %108 = vector.shape_cast %105 : vector<2x8x32xf32> to vector<2x1x8x32xf32>
    %109 = vector.broadcast %107 : vector<2x8x1x32xf32> to vector<2x8x8x32xf32>
    %110 = vector.broadcast %108 : vector<2x1x8x32xf32> to vector<2x8x8x32xf32>
    %111 = arith.addf %109, %110 : vector<2x8x8x32xf32>
    %cst_67 = arith.constant 0.000000e+00 : f32
    %112 = vector.broadcast %cst_67 : f32 to vector<2x8x8x32xf32>
    %113 = arith.cmpf ogt, %111, %112 : vector<2x8x8x32xf32>
    %cst_68 = arith.constant 0.000000e+00 : f32
    %114 = vector.broadcast %cst_68 : f32 to vector<2x8x8x32xf32>
    %115 = arith.minimumf %111, %114 : vector<2x8x8x32xf32>
    %116 = math.exp %115 : vector<2x8x8x32xf32>
    %cst_69 = arith.constant 1.000000e+00 : f32
    %117 = vector.broadcast %cst_69 : f32 to vector<2x8x8x32xf32>
    %118 = arith.subf %116, %117 : vector<2x8x8x32xf32>
    %119 = arith.select %113, %111, %118 : vector<2x8x8x32xi1>, vector<2x8x8x32xf32>
    %120 = vector.shape_cast %106 : vector<2x8x1xf32> to vector<2x1x8x1xf32>
    %121 = vector.broadcast %120 : vector<2x1x8x1xf32> to vector<2x8x8x32xf32>
    %122 = arith.addf %119, %121 : vector<2x8x8x32xf32>
    %cst_70 = arith.constant dense<0xFF800000> : vector<2x8x32xf32>
    %123 = vector.multi_reduction <maximumf>, %122, %cst_70 [2] : vector<2x8x8x32xf32> to vector<2x8x32xf32>
    %124 = vector.shape_cast %123 : vector<2x8x32xf32> to vector<2x8x1x32xf32>
    %125 = vector.broadcast %124 : vector<2x8x1x32xf32> to vector<2x8x8x32xf32>
    %126 = arith.subf %122, %125 : vector<2x8x8x32xf32>
    %127 = math.exp %126 : vector<2x8x8x32xf32>
    %cst_71 = arith.constant dense<0.000000e+00> : vector<2x8x32xf32>
    %128 = vector.multi_reduction <add>, %127, %cst_71 [2] : vector<2x8x8x32xf32> to vector<2x8x32xf32>
    %129 = vector.shape_cast %128 : vector<2x8x32xf32> to vector<2x8x1x32xf32>
    %130 = tpu.reciprocal %129 {approx = true} : vector<2x8x1x32xf32> -> vector<2x8x1x32xf32>
    %131 = vector.broadcast %130 : vector<2x8x1x32xf32> to vector<2x8x8x32xf32>
    %132 = arith.mulf %127, %131 : vector<2x8x8x32xf32>
    %133 = vector.shape_cast %103 : vector<2x8x32xf32> to vector<2x1x8x32xf32>
    %134 = vector.broadcast %133 : vector<2x1x8x32xf32> to vector<2x8x8x32xf32>
    %135 = arith.mulf %132, %134 : vector<2x8x8x32xf32>
    %cst_72 = arith.constant dense<0.000000e+00> : vector<2x8x32xf32>
    %136 = vector.multi_reduction <add>, %135, %cst_72 [2] : vector<2x8x8x32xf32> to vector<2x8x32xf32>
    %137 = vector.shape_cast %136 : vector<2x8x32xf32> to vector<16x32xf32>
    %c0_73 = arith.constant 0 : index
    %c0_74 = arith.constant 0 : index
    %138 = vector.load %arg23[%c0_73, %c0_74] : memref<32x32xf32, #tpu.memory_space<vmem>>, vector<32x32xf32>
    %cst_75 = arith.constant dense<0.000000e+00> : vector<16x32xf32>
    %139 = tpu.matmul %137, %138, %cst_75 {dimension_numbers = #tpu.dot_dimension_numbers<[1], [0], [0], [1], [0, 0, 1, 1], [], []>} : vector<16x32xf32>, vector<32x32xf32>, vector<16x32xf32> -> vector<16x32xf32>
    %c0_76 = arith.constant 0 : index
    %c0_77 = arith.constant 0 : index
    %140 = vector.load %arg24[%c0_76, %c0_77] : memref<1x32xf32, #tpu.memory_space<vmem>>, vector<1x32xf32>
    %141 = vector.broadcast %140 : vector<1x32xf32> to vector<16x32xf32>
    %142 = arith.addf %139, %141 : vector<16x32xf32>
    %143 = math.tanh %142 : vector<16x32xf32>
    %144 = vector.shape_cast %143 : vector<16x32xf32> to vector<2x8x32xf32>
    %c0_78 = arith.constant 0 : index
    %c0_79 = arith.constant 0 : index
    %145 = vector.load %arg25[%c0_78, %c0_79] : memref<32x32xf32, #tpu.memory_space<vmem>>, vector<32x32xf32>
    %cst_80 = arith.constant dense<0.000000e+00> : vector<2x32xf32>
    %146 = tpu.matmul %63, %145, %cst_80 {dimension_numbers = #tpu.dot_dimension_numbers<[1], [0], [0], [1], [0, 0, 1, 1], [], []>} : vector<2x32xf32>, vector<32x32xf32>, vector<2x32xf32> -> vector<2x32xf32>
    %c0_81 = arith.constant 0 : index
    %c0_82 = arith.constant 0 : index
    %147 = vector.load %arg26[%c0_81, %c0_82] : memref<1x32xf32, #tpu.memory_space<vmem>>, vector<1x32xf32>
    %148 = vector.broadcast %147 : vector<1x32xf32> to vector<2x32xf32>
    %149 = arith.addf %146, %148 : vector<2x32xf32>
    %150 = math.tanh %149 : vector<2x32xf32>
    %151 = vector.shape_cast %150 : vector<2x32xf32> to vector<2x1x32xf32>
    %152 = vector.broadcast %151 : vector<2x1x32xf32> to vector<2x8x32xf32>
    %153 = arith.mulf %144, %152 : vector<2x8x32xf32>
    %cst_83 = arith.constant dense<0.000000e+00> : vector<2x8xf32>
    %154 = vector.multi_reduction <add>, %153, %cst_83 [2] : vector<2x8x32xf32> to vector<2x8xf32>
    %155 = vector.shape_cast %154 : vector<2x8xf32> to vector<2x8x1xf32>
    %156 = arith.addf %155, %106 : vector<2x8x1xf32>
    %cst_84 = arith.constant dense<0xFF800000> : vector<2x1xf32>
    %157 = vector.multi_reduction <maximumf>, %156, %cst_84 [1] : vector<2x8x1xf32> to vector<2x1xf32>
    %158 = vector.shape_cast %157 : vector<2x1xf32> to vector<2x1x1xf32>
    %159 = vector.broadcast %158 : vector<2x1x1xf32> to vector<2x8x1xf32>
    %160 = arith.subf %156, %159 : vector<2x8x1xf32>
    %161 = math.exp %160 : vector<2x8x1xf32>
    %cst_85 = arith.constant dense<0.000000e+00> : vector<2x1xf32>
    %162 = vector.multi_reduction <add>, %161, %cst_85 [1] : vector<2x8x1xf32> to vector<2x1xf32>
    %163 = vector.shape_cast %162 : vector<2x1xf32> to vector<2x1x1xf32>
    %164 = tpu.reciprocal %163 {approx = true} : vector<2x1x1xf32> -> vector<2x1x1xf32>
    %165 = vector.broadcast %164 : vector<2x1x1xf32> to vector<2x8x1xf32>
    %166 = arith.mulf %161, %165 : vector<2x8x1xf32>
    %167 = vector.broadcast %166 : vector<2x8x1xf32> to vector<2x8x32xf32>
    %168 = arith.mulf %167, %136 : vector<2x8x32xf32>
    %cst_86 = arith.constant dense<0.000000e+00> : vector<2x32xf32>
    %169 = vector.multi_reduction <add>, %168, %cst_86 [1] : vector<2x8x32xf32> to vector<2x32xf32>
    %c0_87 = arith.constant 0 : index
    %c0_88 = arith.constant 0 : index
    %170 = vector.load %arg27[%c0_87, %c0_88] : memref<32x32xf32, #tpu.memory_space<vmem>>, vector<32x32xf32>
    %cst_89 = arith.constant dense<0.000000e+00> : vector<2x32xf32>
    %171 = tpu.matmul %169, %170, %cst_89 {dimension_numbers = #tpu.dot_dimension_numbers<[1], [0], [0], [1], [0, 0, 1, 1], [], []>} : vector<2x32xf32>, vector<32x32xf32>, vector<2x32xf32> -> vector<2x32xf32>
    %c0_90 = arith.constant 0 : index
    %c0_91 = arith.constant 0 : index
    %172 = vector.load %arg28[%c0_90, %c0_91] : memref<1x32xf32, #tpu.memory_space<vmem>>, vector<1x32xf32>
    %173 = vector.broadcast %172 : vector<1x32xf32> to vector<2x32xf32>
    %174 = arith.addf %171, %173 : vector<2x32xf32>
    %c0_92 = arith.constant 0 : index
    %c0_93 = arith.constant 0 : index
    %175 = vector.load %arg29[%c0_92, %c0_93] : memref<32x32xf32, #tpu.memory_space<vmem>>, vector<32x32xf32>
    %cst_94 = arith.constant dense<0.000000e+00> : vector<2x32xf32>
    %176 = tpu.matmul %63, %175, %cst_94 {dimension_numbers = #tpu.dot_dimension_numbers<[1], [0], [0], [1], [0, 0, 1, 1], [], []>} : vector<2x32xf32>, vector<32x32xf32>, vector<2x32xf32> -> vector<2x32xf32>
    %177 = arith.addf %174, %176 : vector<2x32xf32>
    %c0_95 = arith.constant 0 : index
    %c0_96 = arith.constant 0 : index
    %178 = vector.load %arg30[%c0_95, %c0_96] : memref<1x32xf32, #tpu.memory_space<vmem>>, vector<1x32xf32>
    %179 = vector.broadcast %178 : vector<1x32xf32> to vector<2x32xf32>
    %180 = arith.addf %177, %179 : vector<2x32xf32>
    %cst_97 = arith.constant 0.000000e+00 : f32
    %181 = vector.broadcast %cst_97 : f32 to vector<2x32xf32>
    %182 = arith.subf %181, %180 : vector<2x32xf32>
    %183 = math.exp %182 : vector<2x32xf32>
    %cst_98 = arith.constant 1.000000e+00 : f32
    %184 = vector.broadcast %cst_98 : f32 to vector<2x32xf32>
    %185 = arith.addf %184, %183 : vector<2x32xf32>
    %186 = tpu.reciprocal %185 {approx = true} : vector<2x32xf32> -> vector<2x32xf32>
    %187 = arith.mulf %186, %169 : vector<2x32xf32>
    %cst_99 = arith.constant 1.000000e+00 : f32
    %188 = vector.broadcast %cst_99 : f32 to vector<2x32xf32>
    %189 = arith.subf %188, %186 : vector<2x32xf32>
    %190 = arith.mulf %189, %63 : vector<2x32xf32>
    %191 = arith.addf %187, %190 : vector<2x32xf32>
    %c0_100 = arith.constant 0 : index
    %c0_101 = arith.constant 0 : index
    %192 = vector.load %arg31[%c0_100, %c0_101] : memref<32x8xf32, #tpu.memory_space<vmem>>, vector<32x8xf32>
    %cst_102 = arith.constant dense<0.000000e+00> : vector<2x8xf32>
    %193 = tpu.matmul %191, %192, %cst_102 {dimension_numbers = #tpu.dot_dimension_numbers<[1], [0], [0], [1], [0, 0, 1, 1], [], []>} : vector<2x32xf32>, vector<32x8xf32>, vector<2x8xf32> -> vector<2x8xf32>
    %c0_103 = arith.constant 0 : index
    %c0_104 = arith.constant 0 : index
    %194 = vector.load %arg32[%c0_103, %c0_104] : memref<1x8xf32, #tpu.memory_space<vmem>>, vector<1x8xf32>
    %195 = vector.broadcast %194 : vector<1x8xf32> to vector<2x8xf32>
    %196 = arith.addf %193, %195 : vector<2x8xf32>
    %cst_105 = arith.constant dense<0xFF800000> : vector<2xf32>
    %197 = vector.multi_reduction <maximumf>, %196, %cst_105 [1] : vector<2x8xf32> to vector<2xf32>
    %198 = vector.shape_cast %197 : vector<2xf32> to vector<2x1xf32>
    %199 = vector.broadcast %198 : vector<2x1xf32> to vector<2x8xf32>
    %200 = arith.subf %196, %199 : vector<2x8xf32>
    %201 = math.exp %200 : vector<2x8xf32>
    %cst_106 = arith.constant dense<0.000000e+00> : vector<2xf32>
    %202 = vector.multi_reduction <add>, %201, %cst_106 [1] : vector<2x8xf32> to vector<2xf32>
    %203 = vector.shape_cast %202 : vector<2xf32> to vector<2x1xf32>
    %204 = math.log %203 : vector<2x1xf32>
    %205 = vector.broadcast %204 : vector<2x1xf32> to vector<2x8xf32>
    %206 = arith.subf %200, %205 : vector<2x8xf32>
    %cst_107 = arith.constant 0.000000e+00 : f32
    %207 = vector.broadcast %cst_107 : f32 to vector<2x128xf32>
    %c0_108 = arith.constant 0 : index
    %c0_109 = arith.constant 0 : index
    %208 = vector.load %arg33[%c0_108, %c0_109] : memref<2x128xf32, #tpu.memory_space<vmem>>, vector<2x128xf32>
    tpu.vector_store %arg33[%c0_108, %c0_109], %207 {strides = array<i32>} : memref<2x128xf32, #tpu.memory_space<vmem>>, vector<2x128xf32>,
    %c0_110 = arith.constant 0 : index
    %c0_111 = arith.constant 0 : index
    %209 = vector.load %arg33[%c0_110, %c0_111] : memref<2x128xf32, #tpu.memory_space<vmem>>, vector<2x32xf32>
    tpu.vector_store %arg33[%c0_110, %c0_111], %80 {strides = array<i32>} : memref<2x128xf32, #tpu.memory_space<vmem>>, vector<2x32xf32>,
    %c0_112 = arith.constant 0 : index
    %c32 = arith.constant 32 : index
    %210 = vector.load %arg33[%c0_112, %c32] : memref<2x128xf32, #tpu.memory_space<vmem>>, vector<2x8xf32>
    tpu.vector_store %arg33[%c0_112, %c32], %206 {strides = array<i32>} : memref<2x128xf32, #tpu.memory_space<vmem>>, vector<2x8xf32>,
    return
  }
  func.func @transform_0(%arg0: i32) -> (i32, i32) {
    %c0_i32 = arith.constant 0 : i32
    %c0_i32_0 = arith.constant 0 : i32
    return %arg0, %c0_i32 : i32, i32
  }
  func.func @transform_1(%arg0: i32) -> (i32, i32) {
    %c0_i32 = arith.constant 0 : i32
    %c0_i32_0 = arith.constant 0 : i32
    return %arg0, %c0_i32 : i32, i32
  }
  func.func @transform_2(%arg0: i32) -> (i32, i32, i32) {
    %c0_i32 = arith.constant 0 : i32
    %c0_i32_0 = arith.constant 0 : i32
    %c0_i32_1 = arith.constant 0 : i32
    return %arg0, %c0_i32, %c0_i32_0 : i32, i32, i32
  }
  func.func @transform_3(%arg0: i32) -> (i32, i32, i32) {
    %c0_i32 = arith.constant 0 : i32
    %c0_i32_0 = arith.constant 0 : i32
    %c0_i32_1 = arith.constant 0 : i32
    return %arg0, %c0_i32, %c0_i32_0 : i32, i32, i32
  }
  func.func @transform_4(%arg0: i32) -> (i32, i32) {
    %c0_i32 = arith.constant 0 : i32
    %c0_i32_0 = arith.constant 0 : i32
    %c0_i32_1 = arith.constant 0 : i32
    return %c0_i32, %c0_i32_0 : i32, i32
  }
  func.func @transform_5(%arg0: i32) -> (i32, i32) {
    %c0_i32 = arith.constant 0 : i32
    %c0_i32_0 = arith.constant 0 : i32
    %c0_i32_1 = arith.constant 0 : i32
    return %c0_i32, %c0_i32_0 : i32, i32
  }
  func.func @transform_6(%arg0: i32) -> (i32, i32) {
    %c0_i32 = arith.constant 0 : i32
    %c0_i32_0 = arith.constant 0 : i32
    %c0_i32_1 = arith.constant 0 : i32
    return %c0_i32, %c0_i32_0 : i32, i32
  }
  func.func @transform_7(%arg0: i32) -> (i32, i32) {
    %c0_i32 = arith.constant 0 : i32
    %c0_i32_0 = arith.constant 0 : i32
    %c0_i32_1 = arith.constant 0 : i32
    return %c0_i32, %c0_i32_0 : i32, i32
  }
  func.func @transform_8(%arg0: i32) -> (i32, i32) {
    %c0_i32 = arith.constant 0 : i32
    %c0_i32_0 = arith.constant 0 : i32
    %c0_i32_1 = arith.constant 0 : i32
    return %c0_i32, %c0_i32_0 : i32, i32
  }
  func.func @transform_9(%arg0: i32) -> (i32, i32) {
    %c0_i32 = arith.constant 0 : i32
    %c0_i32_0 = arith.constant 0 : i32
    %c0_i32_1 = arith.constant 0 : i32
    return %c0_i32, %c0_i32_0 : i32, i32
  }
  func.func @transform_10(%arg0: i32) -> (i32, i32) {
    %c0_i32 = arith.constant 0 : i32
    %c0_i32_0 = arith.constant 0 : i32
    %c0_i32_1 = arith.constant 0 : i32
    return %c0_i32, %c0_i32_0 : i32, i32
  }
  func.func @transform_11(%arg0: i32) -> (i32, i32) {
    %c0_i32 = arith.constant 0 : i32
    %c0_i32_0 = arith.constant 0 : i32
    %c0_i32_1 = arith.constant 0 : i32
    return %c0_i32, %c0_i32_0 : i32, i32
  }
  func.func @transform_12(%arg0: i32) -> (i32, i32) {
    %c0_i32 = arith.constant 0 : i32
    %c0_i32_0 = arith.constant 0 : i32
    %c0_i32_1 = arith.constant 0 : i32
    return %c0_i32, %c0_i32_0 : i32, i32
  }
  func.func @transform_13(%arg0: i32) -> (i32, i32) {
    %c0_i32 = arith.constant 0 : i32
    %c0_i32_0 = arith.constant 0 : i32
    %c0_i32_1 = arith.constant 0 : i32
    return %c0_i32, %c0_i32_0 : i32, i32
  }
  func.func @transform_14(%arg0: i32) -> (i32, i32) {
    %c0_i32 = arith.constant 0 : i32
    %c0_i32_0 = arith.constant 0 : i32
    %c0_i32_1 = arith.constant 0 : i32
    return %c0_i32, %c0_i32_0 : i32, i32
  }
  func.func @transform_15(%arg0: i32) -> (i32, i32) {
    %c0_i32 = arith.constant 0 : i32
    %c0_i32_0 = arith.constant 0 : i32
    %c0_i32_1 = arith.constant 0 : i32
    return %c0_i32, %c0_i32_0 : i32, i32
  }
  func.func @transform_16(%arg0: i32) -> (i32, i32) {
    %c0_i32 = arith.constant 0 : i32
    %c0_i32_0 = arith.constant 0 : i32
    %c0_i32_1 = arith.constant 0 : i32
    return %c0_i32, %c0_i32_0 : i32, i32
  }
  func.func @transform_17(%arg0: i32) -> (i32, i32) {
    %c0_i32 = arith.constant 0 : i32
    %c0_i32_0 = arith.constant 0 : i32
    %c0_i32_1 = arith.constant 0 : i32
    return %c0_i32, %c0_i32_0 : i32, i32
  }
  func.func @transform_18(%arg0: i32) -> (i32, i32) {
    %c0_i32 = arith.constant 0 : i32
    %c0_i32_0 = arith.constant 0 : i32
    %c0_i32_1 = arith.constant 0 : i32
    return %c0_i32, %c0_i32_0 : i32, i32
  }
  func.func @transform_19(%arg0: i32) -> (i32, i32) {
    %c0_i32 = arith.constant 0 : i32
    %c0_i32_0 = arith.constant 0 : i32
    %c0_i32_1 = arith.constant 0 : i32
    return %c0_i32, %c0_i32_0 : i32, i32
  }
  func.func @transform_20(%arg0: i32) -> (i32, i32) {
    %c0_i32 = arith.constant 0 : i32
    %c0_i32_0 = arith.constant 0 : i32
    %c0_i32_1 = arith.constant 0 : i32
    return %c0_i32, %c0_i32_0 : i32, i32
  }
  func.func @transform_21(%arg0: i32) -> (i32, i32) {
    %c0_i32 = arith.constant 0 : i32
    %c0_i32_0 = arith.constant 0 : i32
    %c0_i32_1 = arith.constant 0 : i32
    return %c0_i32, %c0_i32_0 : i32, i32
  }
  func.func @transform_22(%arg0: i32) -> (i32, i32) {
    %c0_i32 = arith.constant 0 : i32
    %c0_i32_0 = arith.constant 0 : i32
    %c0_i32_1 = arith.constant 0 : i32
    return %c0_i32, %c0_i32_0 : i32, i32
  }
  func.func @transform_23(%arg0: i32) -> (i32, i32) {
    %c0_i32 = arith.constant 0 : i32
    %c0_i32_0 = arith.constant 0 : i32
    %c0_i32_1 = arith.constant 0 : i32
    return %c0_i32, %c0_i32_0 : i32, i32
  }
  func.func @transform_24(%arg0: i32) -> (i32, i32) {
    %c0_i32 = arith.constant 0 : i32
    %c0_i32_0 = arith.constant 0 : i32
    %c0_i32_1 = arith.constant 0 : i32
    return %c0_i32, %c0_i32_0 : i32, i32
  }
  func.func @transform_25(%arg0: i32) -> (i32, i32) {
    %c0_i32 = arith.constant 0 : i32
    %c0_i32_0 = arith.constant 0 : i32
    %c0_i32_1 = arith.constant 0 : i32
    return %c0_i32, %c0_i32_0 : i32, i32
  }
  func.func @transform_26(%arg0: i32) -> (i32, i32) {
    %c0_i32 = arith.constant 0 : i32
    %c0_i32_0 = arith.constant 0 : i32
    %c0_i32_1 = arith.constant 0 : i32
    return %c0_i32, %c0_i32_0 : i32, i32
  }
  func.func @transform_27(%arg0: i32) -> (i32, i32) {
    %c0_i32 = arith.constant 0 : i32
    %c0_i32_0 = arith.constant 0 : i32
    %c0_i32_1 = arith.constant 0 : i32
    return %c0_i32, %c0_i32_0 : i32, i32
  }
  func.func @transform_28(%arg0: i32) -> (i32, i32) {
    %c0_i32 = arith.constant 0 : i32
    %c0_i32_0 = arith.constant 0 : i32
    %c0_i32_1 = arith.constant 0 : i32
    return %c0_i32, %c0_i32_0 : i32, i32
  }
  func.func @transform_29(%arg0: i32) -> (i32, i32) {
    %c0_i32 = arith.constant 0 : i32
    %c0_i32_0 = arith.constant 0 : i32
    %c0_i32_1 = arith.constant 0 : i32
    return %c0_i32, %c0_i32_0 : i32, i32
  }
  func.func @transform_30(%arg0: i32) -> (i32, i32) {
    %c0_i32 = arith.constant 0 : i32
    %c0_i32_0 = arith.constant 0 : i32
    %c0_i32_1 = arith.constant 0 : i32
    return %c0_i32, %c0_i32_0 : i32, i32
  }
  func.func @transform_31(%arg0: i32) -> (i32, i32) {
    %c0_i32 = arith.constant 0 : i32
    %c0_i32_0 = arith.constant 0 : i32
    %c0_i32_1 = arith.constant 0 : i32
    return %c0_i32, %c0_i32_0 : i32, i32
  }
  func.func @transform_32(%arg0: i32) -> (i32, i32) {
    %c0_i32 = arith.constant 0 : i32
    %c0_i32_0 = arith.constant 0 : i32
    return %arg0, %c0_i32 : i32, i32
  }
}

</mosaic_0001>

<llo_original>
// kernel: tesan_forward.1
$region0: #{tesan_forward.1}
  #allocation0 [shape = 'u32[]', space=smem, size = 0x4, offset = 0x4, fixed_abs, tag = 'smem constant byte address 0x4 - core index']
  #allocation1 [shape = 'u32[144,128]{1,0:T(1,128)}', space=vmem, size = 0x12000, scoped, tag = 'internal scratch']
  %s0 = inlined_call_operand.smem [shape: u32[33], index: -1, kind: input, shape index: {}]
  %s1 = sld [smem:[%s0]]
  %s2 = scalar_lea.smem %s0, 1
  %s3 = sld [smem:[%s2]]
  %s4 = scalar_lea.smem %s0, 2
  %s5 = sld [smem:[%s4]]
  %s6 = scalar_lea.smem %s0, 3
  %s7 = sld [smem:[%s6]]
  %s8 = scalar_lea.smem %s0, 4
  %s9 = sld [smem:[%s8]]
  %s10 = scalar_lea.smem %s0, 5
  %s11 = sld [smem:[%s10]]
  %s12 = scalar_lea.smem %s0, 6
  %s13 = sld [smem:[%s12]]
  %s14 = scalar_lea.smem %s0, 7
  %s15 = sld [smem:[%s14]]
  %s16 = scalar_lea.smem %s0, 8
  %s17 = sld [smem:[%s16]]
  %s18 = scalar_lea.smem %s0, 9
  %s19 = sld [smem:[%s18]]
  %s20 = scalar_lea.smem %s0, 10
  %s21 = sld [smem:[%s20]]
  %s22 = scalar_lea.smem %s0, 11
  %s23 = sld [smem:[%s22]]
  %s24 = scalar_lea.smem %s0, 12
  %s25 = sld [smem:[%s24]]
  %s26 = scalar_lea.smem %s0, 13
  %s27 = sld [smem:[%s26]]
  %s28 = scalar_lea.smem %s0, 14
  %s29 = sld [smem:[%s28]]
  %s30 = scalar_lea.smem %s0, 15
  %s31 = sld [smem:[%s30]]
  %s32 = scalar_lea.smem %s0, 16
  %s33 = sld [smem:[%s32]]
  %s34 = scalar_lea.smem %s0, 17
  %s35 = sld [smem:[%s34]]
  %s36 = scalar_lea.smem %s0, 18
  %s37 = sld [smem:[%s36]]
  %s38 = scalar_lea.smem %s0, 19
  %s39 = sld [smem:[%s38]]
  %s40 = scalar_lea.smem %s0, 20
  %s41 = sld [smem:[%s40]]
  %s42 = scalar_lea.smem %s0, 21
  %s43 = sld [smem:[%s42]]
  %s44 = scalar_lea.smem %s0, 22
  %s45 = sld [smem:[%s44]]
  %s46 = scalar_lea.smem %s0, 23
  %s47 = sld [smem:[%s46]]
  %s48 = scalar_lea.smem %s0, 24
  %s49 = sld [smem:[%s48]]
  %s50 = scalar_lea.smem %s0, 25
  %s51 = sld [smem:[%s50]]
  %s52 = scalar_lea.smem %s0, 26
  %s53 = sld [smem:[%s52]]
  %s54 = scalar_lea.smem %s0, 27
  %s55 = sld [smem:[%s54]]
  %s56 = scalar_lea.smem %s0, 28
  %s57 = sld [smem:[%s56]]
  %s58 = scalar_lea.smem %s0, 29
  %s59 = sld [smem:[%s58]]
  %s60 = scalar_lea.smem %s0, 30
  %s61 = sld [smem:[%s60]]
  %s62 = scalar_lea.smem %s0, 31
  %s63 = sld [smem:[%s62]]
  %s64 = scalar_lea.smem %s0, 32
  %s65 = sld [smem:[%s64]]
  %s66 = sld [smem:[#allocation0]]
  $region158: #{tesan_forward.1} parent=0
    _
  %s68 = ssub.s32 1, %s66
  %s69 = scalar_select 0, %s68, %s66
  $region1: #{tesan_forward.1} parent=0
    #allocation2 [shape = 'u8[8192]{0}', space=vmem, size = 0x2000, scoped, tag = 'input window, operand 13, single buffered']
    #allocation3 [shape = 's32[1]{0}', space=sflag, size = 0x4, scoped, tag = 'scoped memory for tesan_forward.1']
    #allocation4 [shape = 'u8[16384]{0}', space=vmem, size = 0x4000, scoped, tag = 'input window, operand 20, single buffered']
    #allocation5 [shape = 's32[1]{0}', space=sflag, size = 0x4, scoped, tag = 'scoped memory for tesan_forward.1']
    #allocation6 [shape = 'u8[16384]{0}', space=vmem, size = 0x4000, scoped, tag = 'input window, operand 22, single buffered']
    #allocation7 [shape = 'u8[16384]{0}', space=vmem, size = 0x4000, scoped, tag = 'input window, operand 24, single buffered']
    #allocation8 [shape = 's32[1]{0}', space=sflag, size = 0x4, scoped, tag = 'scoped memory for tesan_forward.1']
    #allocation9 [shape = 'u8[16384]{0}', space=vmem, size = 0x4000, scoped, tag = 'input window, operand 28, single buffered']
    %70 = vsyncpa [#allocation3], 0
    %71 = vsyncpa [#allocation5], 0
    %72 = vsyncpa [#allocation8], 0
    // Predicated region
    $region2: #{tesan_forward.1} parent=1 // pred_check
      _
    $region3: #{tesan_forward.1} parent=1 // pred_check_branch
      %74 = sbr.rel (0) target = $region5
    $region4: #{tesan_forward.1} parent=1 // pred_region
      _
    $region5: #{tesan_forward.1} parent=1 // pred_fallthru
      _
    // Predicated region
    $region6: #{tesan_forward.1} parent=1 // pred_check
      _
    $region7: #{tesan_forward.1} parent=1 // pred_check_branch
      %76 = sbr.rel (0) target = $region9
    $region8: #{tesan_forward.1} parent=1 // pred_region
      _
    $region9: #{tesan_forward.1} parent=1 // pred_fallthru
      _
    // Predicated region
    $region10: #{tesan_forward.1} parent=1 // pred_check
      _
    $region11: #{tesan_forward.1} parent=1 // pred_check_branch
      %78 = sbr.rel (0) target = $region13
    $region12: #{tesan_forward.1} parent=1 // pred_region
      _
    $region13: #{tesan_forward.1} parent=1 // pred_fallthru
      _
    // Predicated region
    $region14: #{tesan_forward.1} parent=1 // pred_check
      _
    $region15: #{tesan_forward.1} parent=1 // pred_check_branch
      %80 = sbr.rel (0) target = $region17
    $region16: #{tesan_forward.1} parent=1 // pred_region
      _
    $region17: #{tesan_forward.1} parent=1 // pred_fallthru
      _
    // Predicated region
    $region18: #{tesan_forward.1} parent=1 // pred_check
      _
    $region19: #{tesan_forward.1} parent=1 // pred_check_branch
      %82 = sbr.rel (0) target = $region21
    $region20: #{tesan_forward.1} parent=1 // pred_region
      _
    $region21: #{tesan_forward.1} parent=1 // pred_fallthru
      _
    // Predicated region
    $region22: #{tesan_forward.1} parent=1 // pred_check
      _
    $region23: #{tesan_forward.1} parent=1 // pred_check_branch
      %84 = sbr.rel (0) target = $region25
    $region24: #{tesan_forward.1} parent=1 // pred_region
      _
    $region25: #{tesan_forward.1} parent=1 // pred_fallthru
      _
    // Predicated region
    $region26: #{tesan_forward.1} parent=1 // pred_check
      _
    $region27: #{tesan_forward.1} parent=1 // pred_check_branch
      %86 = sbr.rel (0) target = $region29
    $region28: #{tesan_forward.1} parent=1 // pred_region
      _
    $region29: #{tesan_forward.1} parent=1 // pred_fallthru
      _
    // Predicated region
    $region30: #{tesan_forward.1} parent=1 // pred_check
      _
    $region31: #{tesan_forward.1} parent=1 // pred_check_branch
      %88 = sbr.rel (0) target = $region33
    $region32: #{tesan_forward.1} parent=1 // pred_region
      _
    $region33: #{tesan_forward.1} parent=1 // pred_fallthru
      _
    // Predicated region
    $region34: #{tesan_forward.1} parent=1 // pred_check
      _
    $region35: #{tesan_forward.1} parent=1 // pred_check_branch
      %90 = sbr.rel (0) target = $region37
    $region36: #{tesan_forward.1} parent=1 // pred_region
      _
    $region37: #{tesan_forward.1} parent=1 // pred_fallthru
      _
    // Predicated region
    $region38: #{tesan_forward.1} parent=1 // pred_check
      _
    $region39: #{tesan_forward.1} parent=1 // pred_check_branch
      %92 = sbr.rel (0) target = $region41
    $region40: #{tesan_forward.1} parent=1 // pred_region
      _
    $region41: #{tesan_forward.1} parent=1 // pred_fallthru
      _
    // Predicated region
    $region42: #{tesan_forward.1} parent=1 // pred_check
      _
    $region43: #{tesan_forward.1} parent=1 // pred_check_branch
      %94 = sbr.rel (0) target = $region45
    $region44: #{tesan_forward.1} parent=1 // pred_region
      _
    $region45: #{tesan_forward.1} parent=1 // pred_fallthru
      _
    // Predicated region
    $region46: #{tesan_forward.1} parent=1 // pred_check
      _
    $region47: #{tesan_forward.1} parent=1 // pred_check_branch
      %96 = sbr.rel (0) target = $region49
    $region48: #{tesan_forward.1} parent=1 // pred_region
      _
    $region49: #{tesan_forward.1} parent=1 // pred_fallthru
      _
    // Predicated region
    $region50: #{tesan_forward.1} parent=1 // pred_check
      _
    $region51: #{tesan_forward.1} parent=1 // pred_check_branch
      %98 = sbr.rel (0) target = $region53
    $region52: #{tesan_forward.1} parent=1 // pred_region
      _
    $region53: #{tesan_forward.1} parent=1 // pred_fallthru
      _
    // Predicated region
    $region54: #{tesan_forward.1} parent=1 // pred_check
      _
    $region55: #{tesan_forward.1} parent=1 // pred_check_branch
      %100 = sbr.rel (0) target = $region57
    $region56: #{tesan_forward.1} parent=1 // pred_region
      %s102 = ssub.s32 256, 256
      %103 = vsyncadd [#allocation3], %s102
      %s104 = sshll.u32 [#allocation2], 4
      %s105 = int_to_ptr.vmem [resolvable:$true] %s104
      %110 = dma.hbm_to_vmem [thread:$0]  %s27, 256, %s105, [#allocation3], 128, 128, 8
    $region57: #{tesan_forward.1} parent=1 // pred_fallthru
      _
    // Predicated region
    $region58: #{tesan_forward.1} parent=1 // pred_check
      _
    $region59: #{tesan_forward.1} parent=1 // pred_check_branch
      %112 = sbr.rel (0) target = $region61
    $region60: #{tesan_forward.1} parent=1 // pred_region
      _
    $region61: #{tesan_forward.1} parent=1 // pred_fallthru
      _
    // Predicated region
    $region62: #{tesan_forward.1} parent=1 // pred_check
      _
    $region63: #{tesan_forward.1} parent=1 // pred_check_branch
      %114 = sbr.rel (0) target = $region65
    $region64: #{tesan_forward.1} parent=1 // pred_region
      _
    $region65: #{tesan_forward.1} parent=1 // pred_fallthru
      _
    // Predicated region
    $region66: #{tesan_forward.1} parent=1 // pred_check
      _
    $region67: #{tesan_forward.1} parent=1 // pred_check_branch
      %116 = sbr.rel (0) target = $region69
    $region68: #{tesan_forward.1} parent=1 // pred_region
      _
    $region69: #{tesan_forward.1} parent=1 // pred_fallthru
      _
    // Predicated region
    $region70: #{tesan_forward.1} parent=1 // pred_check
      _
    $region71: #{tesan_forward.1} parent=1 // pred_check_branch
      %118 = sbr.rel (0) target = $region73
    $region72: #{tesan_forward.1} parent=1 // pred_region
      _
    $region73: #{tesan_forward.1} parent=1 // pred_fallthru
      _
    // Predicated region
    $region74: #{tesan_forward.1} parent=1 // pred_check
      _
    $region75: #{tesan_forward.1} parent=1 // pred_check_branch
      %120 = sbr.rel (0) target = $region77
    $region76: #{tesan_forward.1} parent=1 // pred_region
      _
    $region77: #{tesan_forward.1} parent=1 // pred_fallthru
      _
    // Predicated region
    $region78: #{tesan_forward.1} parent=1 // pred_check
      _
    $region79: #{tesan_forward.1} parent=1 // pred_check_branch
      %122 = sbr.rel (0) target = $region81
    $region80: #{tesan_forward.1} parent=1 // pred_region
      _
    $region81: #{tesan_forward.1} parent=1 // pred_fallthru
      _
    // Predicated region
    $region82: #{tesan_forward.1} parent=1 // pred_check
      _
    $region83: #{tesan_forward.1} parent=1 // pred_check_branch
      %124 = sbr.rel (0) target = $region85
    $region84: #{tesan_forward.1} parent=1 // pred_region
      %s126 = ssub.s32 512, 512
      %127 = vsyncadd [#allocation5], %s126
      %s128 = sshll.u32 [#allocation4], 4
      %s129 = int_to_ptr.vmem [resolvable:$true] %s128
      %134 = dma.hbm_to_vmem [thread:$0]  %s41, 512, %s129, [#allocation5], 128, 128, 8
    $region85: #{tesan_forward.1} parent=1 // pred_fallthru
      _
    // Predicated region
    $region86: #{tesan_forward.1} parent=1 // pred_check
      _
    $region87: #{tesan_forward.1} parent=1 // pred_check_branch
      %136 = sbr.rel (0) target = $region89
    $region88: #{tesan_forward.1} parent=1 // pred_region
      _
    $region89: #{tesan_forward.1} parent=1 // pred_fallthru
      _
    // Predicated region
    $region90: #{tesan_forward.1} parent=1 // pred_check
      _
    $region91: #{tesan_forward.1} parent=1 // pred_check_branch
      %138 = sbr.rel (0) target = $region93
    $region92: #{tesan_forward.1} parent=1 // pred_region
      %s140 = ssub.s32 512, 512
      %141 = vsyncadd [#allocation5], %s140
      %s142 = sshll.u32 [#allocation6], 4
      %s143 = int_to_ptr.vmem [resolvable:$true] %s142
      %148 = dma.hbm_to_vmem [thread:$0]  %s45, 512, %s143, [#allocation5], 128, 128, 8
    $region93: #{tesan_forward.1} parent=1 // pred_fallthru
      _
    // Predicated region
    $region94: #{tesan_forward.1} parent=1 // pred_check
      _
    $region95: #{tesan_forward.1} parent=1 // pred_check_branch
      %150 = sbr.rel (0) target = $region97
    $region96: #{tesan_forward.1} parent=1 // pred_region
      _
    $region97: #{tesan_forward.1} parent=1 // pred_fallthru
      _
    // Predicated region
    $region98: #{tesan_forward.1} parent=1 // pred_check
      _
    $region99: #{tesan_forward.1} parent=1 // pred_check_branch
      %152 = sbr.rel (0) target = $region101
    $region100: #{tesan_forward.1} parent=1 // pred_region
      %s154 = ssub.s32 512, 512
      %155 = vsyncadd [#allocation8], %s154
      %s156 = sshll.u32 [#allocation7], 4
      %s157 = int_to_ptr.vmem [resolvable:$true] %s156
      %162 = dma.hbm_to_vmem [thread:$0]  %s49, 512, %s157, [#allocation8], 128, 128, 8
    $region101: #{tesan_forward.1} parent=1 // pred_fallthru
      _
    // Predicated region
    $region102: #{tesan_forward.1} parent=1 // pred_check
      _
    $region103: #{tesan_forward.1} parent=1 // pred_check_branch
      %164 = sbr.rel (0) target = $region105
    $region104: #{tesan_forward.1} parent=1 // pred_region
      _
    $region105: #{tesan_forward.1} parent=1 // pred_fallthru
      _
    // Predicated region
    $region106: #{tesan_forward.1} parent=1 // pred_check
      _
    $region107: #{tesan_forward.1} parent=1 // pred_check_branch
      %166 = sbr.rel (0) target = $region109
    $region108: #{tesan_forward.1} parent=1 // pred_region
      _
    $region109: #{tesan_forward.1} parent=1 // pred_fallthru
      _
    // Predicated region
    $region110: #{tesan_forward.1} parent=1 // pred_check
      _
    $region111: #{tesan_forward.1} parent=1 // pred_check_branch
      %168 = sbr.rel (0) target = $region113
    $region112: #{tesan_forward.1} parent=1 // pred_region
      _
    $region113: #{tesan_forward.1} parent=1 // pred_fallthru
      _
    // Predicated region
    $region114: #{tesan_forward.1} parent=1 // pred_check
      _
    $region115: #{tesan_forward.1} parent=1 // pred_check_branch
      %170 = sbr.rel (0) target = $region117
    $region116: #{tesan_forward.1} parent=1 // pred_region
      %s172 = ssub.s32 512, 512
      %173 = vsyncadd [#allocation8], %s172
      %s174 = sshll.u32 [#allocation9], 4
      %s175 = int_to_ptr.vmem [resolvable:$true] %s174
      %180 = dma.hbm_to_vmem [thread:$0]  %s57, 512, %s175, [#allocation8], 128, 128, 8
    $region117: #{tesan_forward.1} parent=1 // pred_fallthru
      _
    // Predicated region
    $region118: #{tesan_forward.1} parent=1 // pred_check
      _
    $region119: #{tesan_forward.1} parent=1 // pred_check_branch
      %182 = sbr.rel (0) target = $region121
    $region120: #{tesan_forward.1} parent=1 // pred_region
      _
    $region121: #{tesan_forward.1} parent=1 // pred_fallthru
      _
    // Predicated region
    $region122: #{tesan_forward.1} parent=1 // pred_check
      _
    $region123: #{tesan_forward.1} parent=1 // pred_check_branch
      %184 = sbr.rel (0) target = $region125
    $region124: #{tesan_forward.1} parent=1 // pred_region
      _
    $region125: #{tesan_forward.1} parent=1 // pred_fallthru
      _
    // Predicated region
    $region126: #{tesan_forward.1} parent=1 // pred_check
      _
    $region127: #{tesan_forward.1} parent=1 // pred_check_branch
      %186 = sbr.rel (0) target = $region129
    $region128: #{tesan_forward.1} parent=1 // pred_region
      _
    $region129: #{tesan_forward.1} parent=1 // pred_fallthru
      _
    // Predicated region
    $region130: #{tesan_forward.1} parent=1 // pred_check
      _
    $region131: #{tesan_forward.1} parent=1 // pred_check_branch
      %188 = sbr.rel (0) target = $region133
    $region132: #{tesan_forward.1} parent=1 // pred_region
      %189 = dma.done [#allocation3], 256
    $region133: #{tesan_forward.1} parent=1 // pred_fallthru
      _
    // Predicated region
    $region134: #{tesan_forward.1} parent=1 // pred_check
      _
    $region135: #{tesan_forward.1} parent=1 // pred_check_branch
      %191 = sbr.rel (0) target = $region137
    $region136: #{tesan_forward.1} parent=1 // pred_region
      %192 = dma.done [#allocation5], 512
    $region137: #{tesan_forward.1} parent=1 // pred_fallthru
      _
    // Predicated region
    $region138: #{tesan_forward.1} parent=1 // pred_check
      _
    $region139: #{tesan_forward.1} parent=1 // pred_check_branch
      %194 = sbr.rel (0) target = $region141
    $region140: #{tesan_forward.1} parent=1 // pred_region
      %195 = dma.done [#allocation5], 512
    $region141: #{tesan_forward.1} parent=1 // pred_fallthru
      _
    // Predicated region
    $region142: #{tesan_forward.1} parent=1 // pred_check
      _
    $region143: #{tesan_forward.1} parent=1 // pred_check_branch
      %197 = sbr.rel (0) target = $region145
    $region144: #{tesan_forward.1} parent=1 // pred_region
      %198 = dma.done [#allocation8], 512
    $region145: #{tesan_forward.1} parent=1 // pred_fallthru
      _
    // Predicated region
    $region146: #{tesan_forward.1} parent=1 // pred_check
      _
    $region147: #{tesan_forward.1} parent=1 // pred_check_branch
      %200 = sbr.rel (0) target = $region149
    $region148: #{tesan_forward.1} parent=1 // pred_region
      %201 = dma.done [#allocation8], 512
    $region149: #{tesan_forward.1} parent=1 // pred_fallthru
      _
    %v202 = vld [vmem:[%s1] sm:$0x3]
    %v203 = vld [vmem:[%s11] sm:$0xff]
    %v204 = vld [vmem:[%s11 + $0x8] sm:$0xff]
    %v205 = vld [vmem:[%s11 + $0x10] sm:$0xff]
    %v206 = vld [vmem:[%s11 + $0x18] sm:$0xff]
    %v207 = vld [vmem:[%s13] sm:$0x1]
    %v209 = vlaneseq
    %v210 = vshrl.u32 %v209, 7
    %v211 = vsub.s32 0, %v210
    %v212 = vrot.slane %v207, %v211
    %vm214 = vcmask 261120
    %v216 = vsel %vm214, %v202, 0
    %218 = vmatprep.subr.mxu0 0.0
    %219 = vmatpush1.msra.mxu0 %v203
    %220 = vmatprep.subr.mxu0 0.0
    %221 = vmatpush1.msra.mxu0 %v204
    %222 = vmatprep.subr.mxu0 0.0
    %223 = vmatpush1.msra.mxu0 %v205
    %224 = vmatprep.subr.mxu0 0.0
    %225 = vmatpush1.msra.mxu0 %v206
    %226 = vmatprep.subr.mxu0 0.0
    %227 = vmatpush1.msra.mxu0 0.0
    %228 = vmatprep.subr.mxu0 0.0
    %229 = vmatpush1.msra.mxu0 0.0
    %230 = vmatprep.subr.mxu0 0.0
    %231 = vmatpush1.msra.mxu0 0.0
    %232 = vmatprep.subr.mxu0 0.0
    %233 = vmatpush1.msra.mxu0 0.0
    %234 = vmatprep.subr.mxu0 0.0
    %235 = vmatpush1.msra.mxu0 0.0
    %236 = vmatprep.subr.mxu0 0.0
    %237 = vmatpush1.msra.mxu0 0.0
    %238 = vmatprep.subr.mxu0 0.0
    %239 = vmatpush1.msra.mxu0 0.0
    %240 = vmatprep.subr.mxu0 0.0
    %241 = vmatpush1.msra.mxu0 0.0
    %242 = vmatprep.subr.mxu0 0.0
    %243 = vmatpush1.msra.mxu0 0.0
    %244 = vmatprep.subr.mxu0 0.0
    %245 = vmatpush1.msra.mxu0 0.0
    %246 = vmatprep.subr.mxu0 0.0
    %247 = vmatpush1.msra.mxu0 0.0
    %248 = vmatprep.subr.mxu0 0.0
    %249 = vmatpush1.msra.mxu0 0.0
    %250 = vmatprep.subr.mxu0 0.0
    %251 = vmatpush1.msra.mxu0 0.0
    %252 = vmatprep.subr.mxu0 0.0
    %253 = vmatpush1.msra.mxu0 0.0
    %254 = vmatprep.subr.mxu0 0.0
    %255 = vmatpush1.msra.mxu0 0.0
    %256 = vmatprep.subr.mxu0 0.0
    %257 = vmatpush1.msra.mxu0 0.0
    %258 = vmatprep.subr.mxu0 0.0
    %259 = vmatpush1.msra.mxu0 0.0
    %260 = vmatprep.subr.mxu0 0.0
    %261 = vmatpush1.msra.mxu0 0.0
    %262 = vmatprep.subr.mxu0 0.0
    %263 = vmatpush1.msra.mxu0 0.0
    %264 = vmatprep.subr.mxu0 0.0
    %265 = vmatpush1.msra.mxu0 0.0
    %266 = vmatprep.subr.mxu0 0.0
    %267 = vmatpush1.msra.mxu0 0.0
    %268 = vmatprep.subr.mxu0 0.0
    %269 = vmatpush1.msra.mxu0 0.0
    %270 = vmatprep.subr.mxu0 0.0
    %271 = vmatpush1.msra.mxu0 0.0
    %272 = vmatprep.subr.mxu0 0.0
    %273 = vmatpush1.msra.mxu0 0.0
    %274 = vmatprep.subr.mxu0 0.0
    %275 = vmatpush1.msra.mxu0 0.0
    %276 = vmatprep.subr.mxu0 0.0
    %277 = vmatpush1.msra.mxu0 0.0
    %278 = vmatprep.subr.mxu0 0.0
    %279 = vmatpush1.msra.mxu0 0.0
    %280 = vmatprep.subr.mxu0 0.0
    %281 = vmatpush1.msra.mxu0 0.0
    %282 = vmatprep.mubr.f32.mxu0 0.0
    %283 = vmatmul.mubr.f32.gmra.mrb[0].mxu0 %v216
    %v284 = vpop.f32.mrb[0].mxu0
    %v285 = vadd.f32 %v212, %v284
    %v286 = vpop.f32.mrb[0].mxu0
    %287 = vdwg.mxu0
    %v288 = vmax.f32 %v285, 0.0
    %v289 = vand.u32 2147483647, %v285
    %v290 = vsub.f32 0.0, %v289
    %v291 = vmul.f32 %v290, 1.442695
    %v292 = vpow.pop %v291
    %v293 = vadd.f32 %v292, 1.0
    %v294 = vlog2.pop %v293
    %v295 = vmul.f32 %v294, 0.6931472
    %v296 = vadd.f32 %v288, %v295
    %v297 = vld [vmem:[%s15] sm:$0xff]
    %v298 = vld [vmem:[%s15 + $0x8] sm:$0xff]
    %v299 = vld [vmem:[%s15 + $0x10] sm:$0xff]
    %v300 = vld [vmem:[%s15 + $0x18] sm:$0xff]
    %v301 = vld [vmem:[%s17] sm:$0x1]
    %v303 = vlaneseq
    %v304 = vshrl.u32 %v303, 7
    %v305 = vsub.s32 0, %v304
    %v306 = vrot.slane %v301, %v305
    %v309 = vsel %vm214, %v296, 0
    %311 = vmatprep.subr.mxu0 0.0
    %312 = vmatpush1.msra.mxu0 %v297
    %313 = vmatprep.subr.mxu0 0.0
    %314 = vmatpush1.msra.mxu0 %v298
    %315 = vmatprep.subr.mxu0 0.0
    %316 = vmatpush1.msra.mxu0 %v299
    %317 = vmatprep.subr.mxu0 0.0
    %318 = vmatpush1.msra.mxu0 %v300
    %319 = vmatprep.subr.mxu0 0.0
    %320 = vmatpush1.msra.mxu0 0.0
    %321 = vmatprep.subr.mxu0 0.0
    %322 = vmatpush1.msra.mxu0 0.0
    %323 = vmatprep.subr.mxu0 0.0
    %324 = vmatpush1.msra.mxu0 0.0
    %325 = vmatprep.subr.mxu0 0.0
    %326 = vmatpush1.msra.mxu0 0.0
    %327 = vmatprep.subr.mxu0 0.0
    %328 = vmatpush1.msra.mxu0 0.0
    %329 = vmatprep.subr.mxu0 0.0
    %330 = vmatpush1.msra.mxu0 0.0
    %331 = vmatprep.subr.mxu0 0.0
    %332 = vmatpush1.msra.mxu0 0.0
    %333 = vmatprep.subr.mxu0 0.0
    %334 = vmatpush1.msra.mxu0 0.0
    %335 = vmatprep.subr.mxu0 0.0
    %336 = vmatpush1.msra.mxu0 0.0
    %337 = vmatprep.subr.mxu0 0.0
    %338 = vmatpush1.msra.mxu0 0.0
    %339 = vmatprep.subr.mxu0 0.0
    %340 = vmatpush1.msra.mxu0 0.0
    %341 = vmatprep.subr.mxu0 0.0
    %342 = vmatpush1.msra.mxu0 0.0
    %343 = vmatprep.subr.mxu0 0.0
    %344 = vmatpush1.msra.mxu0 0.0
    %345 = vmatprep.subr.mxu0 0.0
    %346 = vmatpush1.msra.mxu0 0.0
    %347 = vmatprep.subr.mxu0 0.0
    %348 = vmatpush1.msra.mxu0 0.0
    %349 = vmatprep.subr.mxu0 0.0
    %350 = vmatpush1.msra.mxu0 0.0
    %351 = vmatprep.subr.mxu0 0.0
    %352 = vmatpush1.msra.mxu0 0.0
    %353 = vmatprep.subr.mxu0 0.0
    %354 = vmatpush1.msra.mxu0 0.0
    %355 = vmatprep.subr.mxu0 0.0
    %356 = vmatpush1.msra.mxu0 0.0
    %357 = vmatprep.subr.mxu0 0.0
    %358 = vmatpush1.msra.mxu0 0.0
    %359 = vmatprep.subr.mxu0 0.0
    %360 = vmatpush1.msra.mxu0 0.0
    %361 = vmatprep.subr.mxu0 0.0
    %362 = vmatpush1.msra.mxu0 0.0
    %363 = vmatprep.subr.mxu0 0.0
    %364 = vmatpush1.msra.mxu0 0.0
    %365 = vmatprep.subr.mxu0 0.0
    %366 = vmatpush1.msra.mxu0 0.0
    %367 = vmatprep.subr.mxu0 0.0
    %368 = vmatpush1.msra.mxu0 0.0
    %369 = vmatprep.subr.mxu0 0.0
    %370 = vmatpush1.msra.mxu0 0.0
    %371 = vmatprep.subr.mxu0 0.0
    %372 = vmatpush1.msra.mxu0 0.0
    %373 = vmatprep.subr.mxu0 0.0
    %374 = vmatpush1.msra.mxu0 0.0
    %375 = vmatprep.mubr.f32.mxu0 0.0
    %376 = vmatmul.mubr.f32.gmra.mrb[0].mxu0 %v309
    %v377 = vpop.f32.mrb[0].mxu0
    %v378 = vadd.f32 %v306, %v377
    %v379 = vpop.f32.mrb[0].mxu0
    %380 = vdwg.mxu0
    %v381 = vmax.f32 %v378, 0.0
    %v382 = vand.u32 2147483647, %v378
    %v383 = vsub.f32 0.0, %v382
    %v384 = vmul.f32 %v383, 1.442695
    %v385 = vpow.pop %v384
    %v386 = vadd.f32 %v385, 1.0
    %v387 = vlog2.pop %v386
    %v388 = vmul.f32 %v387, 0.6931472
    %v389 = vadd.f32 %v381, %v388
    %v390 = vld [vmem:[%s19] sm:$0xff]
    %v391 = vld [vmem:[%s19 + $0x8] sm:$0xff]
    %v392 = vld [vmem:[%s19 + $0x10] sm:$0xff]
    %v393 = vld [vmem:[%s19 + $0x18] sm:$0xff]
    %v394 = vld [vmem:[%s21] sm:$0x1]
    %v396 = vlaneseq
    %v397 = vshrl.u32 %v396, 7
    %v398 = vsub.s32 0, %v397
    %v399 = vrot.slane %v394, %v398
    %v402 = vsel %vm214, %v389, 0
    %404 = vmatprep.subr.mxu0 0.0
    %405 = vmatpush1.msra.mxu0 %v390
    %406 = vmatprep.subr.mxu0 0.0
    %407 = vmatpush1.msra.mxu0 %v391
    %408 = vmatprep.subr.mxu0 0.0
    %409 = vmatpush1.msra.mxu0 %v392
    %410 = vmatprep.subr.mxu0 0.0
    %411 = vmatpush1.msra.mxu0 %v393
    %412 = vmatprep.subr.mxu0 0.0
    %413 = vmatpush1.msra.mxu0 0.0
    %414 = vmatprep.subr.mxu0 0.0
    %415 = vmatpush1.msra.mxu0 0.0
    %416 = vmatprep.subr.mxu0 0.0
    %417 = vmatpush1.msra.mxu0 0.0
    %418 = vmatprep.subr.mxu0 0.0
    %419 = vmatpush1.msra.mxu0 0.0
    %420 = vmatprep.subr.mxu0 0.0
    %421 = vmatpush1.msra.mxu0 0.0
    %422 = vmatprep.subr.mxu0 0.0
    %423 = vmatpush1.msra.mxu0 0.0
    %424 = vmatprep.subr.mxu0 0.0
    %425 = vmatpush1.msra.mxu0 0.0
    %426 = vmatprep.subr.mxu0 0.0
    %427 = vmatpush1.msra.mxu0 0.0
    %428 = vmatprep.subr.mxu0 0.0
    %429 = vmatpush1.msra.mxu0 0.0
    %430 = vmatprep.subr.mxu0 0.0
    %431 = vmatpush1.msra.mxu0 0.0
    %432 = vmatprep.subr.mxu0 0.0
    %433 = vmatpush1.msra.mxu0 0.0
    %434 = vmatprep.subr.mxu0 0.0
    %435 = vmatpush1.msra.mxu0 0.0
    %436 = vmatprep.subr.mxu0 0.0
    %437 = vmatpush1.msra.mxu0 0.0
    %438 = vmatprep.subr.mxu0 0.0
    %439 = vmatpush1.msra.mxu0 0.0
    %440 = vmatprep.subr.mxu0 0.0
    %441 = vmatpush1.msra.mxu0 0.0
    %442 = vmatprep.subr.mxu0 0.0
    %443 = vmatpush1.msra.mxu0 0.0
    %444 = vmatprep.subr.mxu0 0.0
    %445 = vmatpush1.msra.mxu0 0.0
    %446 = vmatprep.subr.mxu0 0.0
    %447 = vmatpush1.msra.mxu0 0.0
    %448 = vmatprep.subr.mxu0 0.0
    %449 = vmatpush1.msra.mxu0 0.0
    %450 = vmatprep.subr.mxu0 0.0
    %451 = vmatpush1.msra.mxu0 0.0
    %452 = vmatprep.subr.mxu0 0.0
    %453 = vmatpush1.msra.mxu0 0.0
    %454 = vmatprep.subr.mxu0 0.0
    %455 = vmatpush1.msra.mxu0 0.0
    %456 = vmatprep.subr.mxu0 0.0
    %457 = vmatpush1.msra.mxu0 0.0
    %458 = vmatprep.subr.mxu0 0.0
    %459 = vmatpush1.msra.mxu0 0.0
    %460 = vmatprep.subr.mxu0 0.0
    %461 = vmatpush1.msra.mxu0 0.0
    %462 = vmatprep.subr.mxu0 0.0
    %463 = vmatpush1.msra.mxu0 0.0
    %464 = vmatprep.subr.mxu0 0.0
    %465 = vmatpush1.msra.mxu0 0.0
    %466 = vmatprep.subr.mxu0 0.0
    %467 = vmatpush1.msra.mxu0 0.0
    %468 = vmatprep.mubr.f32.mxu0 0.0
    %469 = vmatmul.mubr.f32.gmra.mrb[0].mxu0 %v402
    %v470 = vpop.f32.mrb[0].mxu0
    %v471 = vadd.f32 %v399, %v470
    %v472 = vpop.f32.mrb[0].mxu0
    %473 = vdwg.mxu0
    %v474 = vmul.f32 %v471, 0.999995
    %v475 = vld [vmem:[%s23] sm:$0xff]
    %v476 = vld [vmem:[%s23 + $0x8] sm:$0xff]
    %v477 = vld [vmem:[%s23 + $0x10] sm:$0xff]
    %v478 = vld [vmem:[%s23 + $0x18] sm:$0xff]
    %v479 = vld [vmem:[%s25] sm:$0x1]
    %v481 = vlaneseq
    %v482 = vshrl.u32 %v481, 7
    %v483 = vsub.s32 0, %v482
    %v484 = vrot.slane %v479, %v483
    %486 = vmatprep.subr.mxu0 0.0
    %487 = vmatpush1.msra.mxu0 %v475
    %488 = vmatprep.subr.mxu0 0.0
    %489 = vmatpush1.msra.mxu0 %v476
    %490 = vmatprep.subr.mxu0 0.0
    %491 = vmatpush1.msra.mxu0 %v477
    %492 = vmatprep.subr.mxu0 0.0
    %493 = vmatpush1.msra.mxu0 %v478
    %494 = vmatprep.subr.mxu0 0.0
    %495 = vmatpush1.msra.mxu0 0.0
    %496 = vmatprep.subr.mxu0 0.0
    %497 = vmatpush1.msra.mxu0 0.0
    %498 = vmatprep.subr.mxu0 0.0
    %499 = vmatpush1.msra.mxu0 0.0
    %500 = vmatprep.subr.mxu0 0.0
    %501 = vmatpush1.msra.mxu0 0.0
    %502 = vmatprep.subr.mxu0 0.0
    %503 = vmatpush1.msra.mxu0 0.0
    %504 = vmatprep.subr.mxu0 0.0
    %505 = vmatpush1.msra.mxu0 0.0
    %506 = vmatprep.subr.mxu0 0.0
    %507 = vmatpush1.msra.mxu0 0.0
    %508 = vmatprep.subr.mxu0 0.0
    %509 = vmatpush1.msra.mxu0 0.0
    %510 = vmatprep.subr.mxu0 0.0
    %511 = vmatpush1.msra.mxu0 0.0
    %512 = vmatprep.subr.mxu0 0.0
    %513 = vmatpush1.msra.mxu0 0.0
    %514 = vmatprep.subr.mxu0 0.0
    %515 = vmatpush1.msra.mxu0 0.0
    %516 = vmatprep.subr.mxu0 0.0
    %517 = vmatpush1.msra.mxu0 0.0
    %518 = vmatprep.subr.mxu0 0.0
    %519 = vmatpush1.msra.mxu0 0.0
    %520 = vmatprep.subr.mxu0 0.0
    %521 = vmatpush1.msra.mxu0 0.0
    %522 = vmatprep.subr.mxu0 0.0
    %523 = vmatpush1.msra.mxu0 0.0
    %524 = vmatprep.subr.mxu0 0.0
    %525 = vmatpush1.msra.mxu0 0.0
    %526 = vmatprep.subr.mxu0 0.0
    %527 = vmatpush1.msra.mxu0 0.0
    %528 = vmatprep.subr.mxu0 0.0
    %529 = vmatpush1.msra.mxu0 0.0
    %530 = vmatprep.subr.mxu0 0.0
    %531 = vmatpush1.msra.mxu0 0.0
    %532 = vmatprep.subr.mxu0 0.0
    %533 = vmatpush1.msra.mxu0 0.0
    %534 = vmatprep.subr.mxu0 0.0
    %535 = vmatpush1.msra.mxu0 0.0
    %536 = vmatprep.subr.mxu0 0.0
    %537 = vmatpush1.msra.mxu0 0.0
    %538 = vmatprep.subr.mxu0 0.0
    %539 = vmatpush1.msra.mxu0 0.0
    %540 = vmatprep.subr.mxu0 0.0
    %541 = vmatpush1.msra.mxu0 0.0
    %542 = vmatprep.subr.mxu0 0.0
    %543 = vmatpush1.msra.mxu0 0.0
    %544 = vmatprep.subr.mxu0 0.0
    %545 = vmatpush1.msra.mxu0 0.0
    %546 = vmatprep.subr.mxu0 0.0
    %547 = vmatpush1.msra.mxu0 0.0
    %548 = vmatprep.subr.mxu0 0.0
    %549 = vmatpush1.msra.mxu0 0.0
    %550 = vmatprep.mubr.f32.mxu0 0.0
    %551 = vmatmul.mubr.f32.gmra.mrb[0].mxu0 %v402
    %v552 = vpop.f32.mrb[0].mxu0
    %v553 = vadd.f32 %v484, %v552
    %v554 = vpop.f32.mrb[0].mxu0
    %555 = vdwg.mxu0
    %v556 = vmul.f32 %v553, 0.999995
    %v557 = vmul.f32 %v556, 0.5
    %v558 = vmul.f32 %v557, 1.442695
    %v559 = vpow.pop %v558
    %v560 = vld [vmem:[%s3] sm:$0x3]
    %v561 = vmul.f32 %v559, %v560
    %v562 = vadd.f32 %v474, %v561
    %vm563 = vcmask 123904
    %v564 = vsel %vm563, %v562, -inf
    %565 = vmax.xlane.f32.xlu0 %v564
    %v566 = vpop.xlane.xlu0 %565
    %v567 = vsub.f32 %v562, %v566
    %v568 = vmul.f32 %v567, 1.442695
    %v569 = vpow.pop %v568
    %v570 = vsel %vm563, %v569, 0.0
    %571 = vadd.xlane.f32.xlu0 %v570
    %v572 = vpop.xlane.xlu0 %571
    %v573 = vrcp.pop %v572
    %v574 = vmul.f32 %v569, %v573
    %v575 = vld [vmem:[#allocation2] sm:$0xff]
    %v576 = vld [vmem:[#allocation2 + $0x8] sm:$0xff]
    %vm577 = vcmask 130048
    %v579 = vsel %vm577, %v574, 0
    %581 = vmatprep.subr.mxu0 0.0
    %582 = vmatpush1.msra.mxu0 %v575
    %583 = vmatprep.subr.mxu0 0.0
    %584 = vmatpush1.msra.mxu0 %v576
    %585 = vmatprep.subr.mxu0 0.0
    %586 = vmatpush1.msra.mxu0 0.0
    %587 = vmatprep.subr.mxu0 0.0
    %588 = vmatpush1.msra.mxu0 0.0
    %589 = vmatprep.subr.mxu0 0.0
    %590 = vmatpush1.msra.mxu0 0.0
    %591 = vmatprep.subr.mxu0 0.0
    %592 = vmatpush1.msra.mxu0 0.0
    %593 = vmatprep.subr.mxu0 0.0
    %594 = vmatpush1.msra.mxu0 0.0
    %595 = vmatprep.subr.mxu0 0.0
    %596 = vmatpush1.msra.mxu0 0.0
    %597 = vmatprep.subr.mxu0 0.0
    %598 = vmatpush1.msra.mxu0 0.0
    %599 = vmatprep.subr.mxu0 0.0
    %600 = vmatpush1.msra.mxu0 0.0
    %601 = vmatprep.subr.mxu0 0.0
    %602 = vmatpush1.msra.mxu0 0.0
    %603 = vmatprep.subr.mxu0 0.0
    %604 = vmatpush1.msra.mxu0 0.0
    %605 = vmatprep.subr.mxu0 0.0
    %606 = vmatpush1.msra.mxu0 0.0
    %607 = vmatprep.subr.mxu0 0.0
    %608 = vmatpush1.msra.mxu0 0.0
    %609 = vmatprep.subr.mxu0 0.0
    %610 = vmatpush1.msra.mxu0 0.0
    %611 = vmatprep.subr.mxu0 0.0
    %612 = vmatpush1.msra.mxu0 0.0
    %613 = vmatprep.subr.mxu0 0.0
    %614 = vmatpush1.msra.mxu0 0.0
    %615 = vmatprep.subr.mxu0 0.0
    %616 = vmatpush1.msra.mxu0 0.0
    %617 = vmatprep.subr.mxu0 0.0
    %618 = vmatpush1.msra.mxu0 0.0
    %619 = vmatprep.subr.mxu0 0.0
    %620 = vmatpush1.msra.mxu0 0.0
    %621 = vmatprep.subr.mxu0 0.0
    %622 = vmatpush1.msra.mxu0 0.0
    %623 = vmatprep.subr.mxu0 0.0
    %624 = vmatpush1.msra.mxu0 0.0
    %625 = vmatprep.subr.mxu0 0.0
    %626 = vmatpush1.msra.mxu0 0.0
    %627 = vmatprep.subr.mxu0 0.0
    %628 = vmatpush1.msra.mxu0 0.0
    %629 = vmatprep.subr.mxu0 0.0
    %630 = vmatpush1.msra.mxu0 0.0
    %631 = vmatprep.subr.mxu0 0.0
    %632 = vmatpush1.msra.mxu0 0.0
    %633 = vmatprep.subr.mxu0 0.0
    %634 = vmatpush1.msra.mxu0 0.0
    %635 = vmatprep.subr.mxu0 0.0
    %636 = vmatpush1.msra.mxu0 0.0
    %637 = vmatprep.subr.mxu0 0.0
    %638 = vmatpush1.msra.mxu0 0.0
    %639 = vmatprep.subr.mxu0 0.0
    %640 = vmatpush1.msra.mxu0 0.0
    %641 = vmatprep.subr.mxu0 0.0
    %642 = vmatpush1.msra.mxu0 0.0
    %643 = vmatprep.subr.mxu0 0.0
    %644 = vmatpush1.msra.mxu0 0.0
    %645 = vmatprep.mubr.f32.mxu0 0.0
    %646 = vmatmul.mubr.f32.gmra.mrb[0].mxu0 %v579
    %v647 = vpop.f32.mrb[0].mxu0
    %v648 = vadd.f32 0.0, %v647
    %v649 = vpop.f32.mrb[0].mxu0
    %650 = vdwg.mxu0
    %v651 = vtanh.pop %v648
    %v652 = vld [vmem:[%s29] sm:$0xff]
    %v653 = vld [vmem:[%s29 + $0x8] sm:$0xff]
    %v654 = vld [vmem:[%s29 + $0x10] sm:$0xff]
    %v655 = vld [vmem:[%s29 + $0x18] sm:$0xff]
    %v656 = vld [vmem:[%s31] sm:$0x1]
    %v658 = vlaneseq
    %v659 = vshrl.u32 %v658, 7
    %v660 = vsub.s32 0, %v659
    %v661 = vrot.slane %v656, %v660
    %v664 = vsel %vm214, %v651, 0
    %666 = vmatprep.subr.mxu0 0.0
    %667 = vmatpush1.msra.mxu0 %v652
    %668 = vmatprep.subr.mxu0 0.0
    %669 = vmatpush1.msra.mxu0 %v653
    %670 = vmatprep.subr.mxu0 0.0
    %671 = vmatpush1.msra.mxu0 %v654
    %672 = vmatprep.subr.mxu0 0.0
    %673 = vmatpush1.msra.mxu0 %v655
    %674 = vmatprep.subr.mxu0 0.0
    %675 = vmatpush1.msra.mxu0 0.0
    %676 = vmatprep.subr.mxu0 0.0
    %677 = vmatpush1.msra.mxu0 0.0
    %678 = vmatprep.subr.mxu0 0.0
    %679 = vmatpush1.msra.mxu0 0.0
    %680 = vmatprep.subr.mxu0 0.0
    %681 = vmatpush1.msra.mxu0 0.0
    %682 = vmatprep.subr.mxu0 0.0
    %683 = vmatpush1.msra.mxu0 0.0
    %684 = vmatprep.subr.mxu0 0.0
    %685 = vmatpush1.msra.mxu0 0.0
    %686 = vmatprep.subr.mxu0 0.0
    %687 = vmatpush1.msra.mxu0 0.0
    %688 = vmatprep.subr.mxu0 0.0
    %689 = vmatpush1.msra.mxu0 0.0
    %690 = vmatprep.subr.mxu0 0.0
    %691 = vmatpush1.msra.mxu0 0.0
    %692 = vmatprep.subr.mxu0 0.0
    %693 = vmatpush1.msra.mxu0 0.0
    %694 = vmatprep.subr.mxu0 0.0
    %695 = vmatpush1.msra.mxu0 0.0
    %696 = vmatprep.subr.mxu0 0.0
    %697 = vmatpush1.msra.mxu0 0.0
    %698 = vmatprep.subr.mxu0 0.0
    %699 = vmatpush1.msra.mxu0 0.0
    %700 = vmatprep.subr.mxu0 0.0
    %701 = vmatpush1.msra.mxu0 0.0
    %702 = vmatprep.subr.mxu0 0.0
    %703 = vmatpush1.msra.mxu0 0.0
    %704 = vmatprep.subr.mxu0 0.0
    %705 = vmatpush1.msra.mxu0 0.0
    %706 = vmatprep.subr.mxu0 0.0
    %707 = vmatpush1.msra.mxu0 0.0
    %708 = vmatprep.subr.mxu0 0.0
    %709 = vmatpush1.msra.mxu0 0.0
    %710 = vmatprep.subr.mxu0 0.0
    %711 = vmatpush1.msra.mxu0 0.0
    %712 = vmatprep.subr.mxu0 0.0
    %713 = vmatpush1.msra.mxu0 0.0
    %714 = vmatprep.subr.mxu0 0.0
    %715 = vmatpush1.msra.mxu0 0.0
    %716 = vmatprep.subr.mxu0 0.0
    %717 = vmatpush1.msra.mxu0 0.0
    %718 = vmatprep.subr.mxu0 0.0
    %719 = vmatpush1.msra.mxu0 0.0
    %720 = vmatprep.subr.mxu0 0.0
    %721 = vmatpush1.msra.mxu0 0.0
    %722 = vmatprep.subr.mxu0 0.0
    %723 = vmatpush1.msra.mxu0 0.0
    %724 = vmatprep.subr.mxu0 0.0
    %725 = vmatpush1.msra.mxu0 0.0
    %726 = vmatprep.subr.mxu0 0.0
    %727 = vmatpush1.msra.mxu0 0.0
    %728 = vmatprep.subr.mxu0 0.0
    %729 = vmatpush1.msra.mxu0 0.0
    %730 = vmatprep.mubr.f32.mxu0 0.0
    %731 = vmatmul.mubr.f32.gmra.mrb[0].mxu0 %v664
    %v732 = vpop.f32.mrb[0].mxu0
    %v733 = vadd.f32 %v661, %v732
    %v734 = vpop.f32.mrb[0].mxu0
    %735 = vdwg.mxu0
    %v736 = vmul.f32 %v733, 0.999995
    %vm737 = vcmask 254976
    %v738 = vsel %vm737, %v736, -inf
    %739 = vmax.xlane.f32.xlu0 %v738
    %v740 = vpop.xlane.xlu0 %739
    %v741 = vsub.f32 %v736, %v740
    %v742 = vmul.f32 %v741, 1.442695
    %v743 = vpow.pop %v742
    %v744 = vsel %vm737, %v743, 0.0
    %745 = vadd.xlane.f32.xlu0 %v744
    %v746 = vpop.xlane.xlu0 %745
    %v747 = vrcp.pop %v746
    %v748 = vmul.f32 %v743, %v747
    %v749 = vld [vmem:[%s5] sm:$0xff]
    %v750 = vld [vmem:[%s5 + $0x8] sm:$0xff]
    %v751 = vld [vmem:[%s9] sm:$0xff]
    %v752 = vadd.f32 %v749, %v751
    %v753 = vadd.f32 %v750, %v751
    %v754 = vld [vmem:[%s33] sm:$0xff]
    %v755 = vld [vmem:[%s33 + $0x8] sm:$0xff]
    %v756 = vld [vmem:[%s33 + $0x10] sm:$0xff]
    %v757 = vld [vmem:[%s33 + $0x18] sm:$0xff]
    %v758 = vld [vmem:[%s35] sm:$0x1]
    %v760 = vlaneseq
    %v761 = vshrl.u32 %v760, 7
    %v762 = vsub.s32 0, %v761
    %v763 = vrot.slane %v758, %v762
    %v766 = vsel %vm214, %v752, 0
    %v769 = vsel %vm214, %v753, 0
    %771 = vmatprep.subr.mxu0 0.0
    %772 = vmatpush1.msra.mxu0 %v754
    %773 = vmatprep.subr.mxu0 0.0
    %774 = vmatpush1.msra.mxu0 %v755
    %775 = vmatprep.subr.mxu0 0.0
    %776 = vmatpush1.msra.mxu0 %v756
    %777 = vmatprep.subr.mxu0 0.0
    %778 = vmatpush1.msra.mxu0 %v757
    %779 = vmatprep.subr.mxu0 0.0
    %780 = vmatpush1.msra.mxu0 0.0
    %781 = vmatprep.subr.mxu0 0.0
    %782 = vmatpush1.msra.mxu0 0.0
    %783 = vmatprep.subr.mxu0 0.0
    %784 = vmatpush1.msra.mxu0 0.0
    %785 = vmatprep.subr.mxu0 0.0
    %786 = vmatpush1.msra.mxu0 0.0
    %787 = vmatprep.subr.mxu0 0.0
    %788 = vmatpush1.msra.mxu0 0.0
    %789 = vmatprep.subr.mxu0 0.0
    %790 = vmatpush1.msra.mxu0 0.0
    %791 = vmatprep.subr.mxu0 0.0
    %792 = vmatpush1.msra.mxu0 0.0
    %793 = vmatprep.subr.mxu0 0.0
    %794 = vmatpush1.msra.mxu0 0.0
    %795 = vmatprep.subr.mxu0 0.0
    %796 = vmatpush1.msra.mxu0 0.0
    %797 = vmatprep.subr.mxu0 0.0
    %798 = vmatpush1.msra.mxu0 0.0
    %799 = vmatprep.subr.mxu0 0.0
    %800 = vmatpush1.msra.mxu0 0.0
    %801 = vmatprep.subr.mxu0 0.0
    %802 = vmatpush1.msra.mxu0 0.0
    %803 = vmatprep.subr.mxu0 0.0
    %804 = vmatpush1.msra.mxu0 0.0
    %805 = vmatprep.subr.mxu0 0.0
    %806 = vmatpush1.msra.mxu0 0.0
    %807 = vmatprep.subr.mxu0 0.0
    %808 = vmatpush1.msra.mxu0 0.0
    %809 = vmatprep.subr.mxu0 0.0
    %810 = vmatpush1.msra.mxu0 0.0
    %811 = vmatprep.subr.mxu0 0.0
    %812 = vmatpush1.msra.mxu0 0.0
    %813 = vmatprep.subr.mxu0 0.0
    %814 = vmatpush1.msra.mxu0 0.0
    %815 = vmatprep.subr.mxu0 0.0
    %816 = vmatpush1.msra.mxu0 0.0
    %817 = vmatprep.subr.mxu0 0.0
    %818 = vmatpush1.msra.mxu0 0.0
    %819 = vmatprep.subr.mxu0 0.0
    %820 = vmatpush1.msra.mxu0 0.0
    %821 = vmatprep.subr.mxu0 0.0
    %822 = vmatpush1.msra.mxu0 0.0
    %823 = vmatprep.subr.mxu0 0.0
    %824 = vmatpush1.msra.mxu0 0.0
    %825 = vmatprep.subr.mxu0 0.0
    %826 = vmatpush1.msra.mxu0 0.0
    %827 = vmatprep.subr.mxu0 0.0
    %828 = vmatpush1.msra.mxu0 0.0
    %829 = vmatprep.subr.mxu0 0.0
    %830 = vmatpush1.msra.mxu0 0.0
    %831 = vmatprep.subr.mxu0 0.0
    %832 = vmatpush1.msra.mxu0 0.0
    %833 = vmatprep.subr.mxu0 0.0
    %834 = vmatpush1.msra.mxu0 0.0
    %835 = vmatprep.mubr.f32.mxu0 0.0
    %836 = vmatmul.mubr.f32.gmra.mrb[0].mxu0 %v766
    %v837 = vpop.f32.mrb[0].mxu0
    %v838 = vadd.f32 %v763, %v837
    %v839 = vpop.f32.mrb[0].mxu0
    %840 = vmatprep.mubr.f32.mxu0 0.0
    %841 = vmatmul.mubr.f32.gmra.mrb[0].mxu0 %v769
    %v842 = vpop.f32.mrb[0].mxu0
    %v843 = vadd.f32 %v763, %v842
    %v844 = vpop.f32.mrb[0].mxu0
    %845 = vdwg.mxu0
    %v846 = vtanh.pop %v838
    %v847 = vtanh.pop %v843
    %v848 = vld [vmem:[%s37] sm:$0xff]
    %v849 = vld [vmem:[%s37 + $0x8] sm:$0xff]
    %v850 = vld [vmem:[%s37 + $0x10] sm:$0xff]
    %v851 = vld [vmem:[%s37 + $0x18] sm:$0xff]
    %v852 = vld [vmem:[%s39] sm:$0x1]
    %v854 = vlaneseq
    %v855 = vshrl.u32 %v854, 7
    %v856 = vsub.s32 0, %v855
    %v857 = vrot.slane %v852, %v856
    %v860 = vsel %vm214, %v846, 0
    %v863 = vsel %vm214, %v847, 0
    %865 = vmatprep.subr.mxu0 0.0
    %866 = vmatpush1.msra.mxu0 %v848
    %867 = vmatprep.subr.mxu0 0.0
    %868 = vmatpush1.msra.mxu0 %v849
    %869 = vmatprep.subr.mxu0 0.0
    %870 = vmatpush1.msra.mxu0 %v850
    %871 = vmatprep.subr.mxu0 0.0
    %872 = vmatpush1.msra.mxu0 %v851
    %873 = vmatprep.subr.mxu0 0.0
    %874 = vmatpush1.msra.mxu0 0.0
    %875 = vmatprep.subr.mxu0 0.0
    %876 = vmatpush1.msra.mxu0 0.0
    %877 = vmatprep.subr.mxu0 0.0
    %878 = vmatpush1.msra.mxu0 0.0
    %879 = vmatprep.subr.mxu0 0.0
    %880 = vmatpush1.msra.mxu0 0.0
    %881 = vmatprep.subr.mxu0 0.0
    %882 = vmatpush1.msra.mxu0 0.0
    %883 = vmatprep.subr.mxu0 0.0
    %884 = vmatpush1.msra.mxu0 0.0
    %885 = vmatprep.subr.mxu0 0.0
    %886 = vmatpush1.msra.mxu0 0.0
    %887 = vmatprep.subr.mxu0 0.0
    %888 = vmatpush1.msra.mxu0 0.0
    %889 = vmatprep.subr.mxu0 0.0
    %890 = vmatpush1.msra.mxu0 0.0
    %891 = vmatprep.subr.mxu0 0.0
    %892 = vmatpush1.msra.mxu0 0.0
    %893 = vmatprep.subr.mxu0 0.0
    %894 = vmatpush1.msra.mxu0 0.0
    %895 = vmatprep.subr.mxu0 0.0
    %896 = vmatpush1.msra.mxu0 0.0
    %897 = vmatprep.subr.mxu0 0.0
    %898 = vmatpush1.msra.mxu0 0.0
    %899 = vmatprep.subr.mxu0 0.0
    %900 = vmatpush1.msra.mxu0 0.0
    %901 = vmatprep.subr.mxu0 0.0
    %902 = vmatpush1.msra.mxu0 0.0
    %903 = vmatprep.subr.mxu0 0.0
    %904 = vmatpush1.msra.mxu0 0.0
    %905 = vmatprep.subr.mxu0 0.0
    %906 = vmatpush1.msra.mxu0 0.0
    %907 = vmatprep.subr.mxu0 0.0
    %908 = vmatpush1.msra.mxu0 0.0
    %909 = vmatprep.subr.mxu0 0.0
    %910 = vmatpush1.msra.mxu0 0.0
    %911 = vmatprep.subr.mxu0 0.0
    %912 = vmatpush1.msra.mxu0 0.0
    %913 = vmatprep.subr.mxu0 0.0
    %914 = vmatpush1.msra.mxu0 0.0
    %915 = vmatprep.subr.mxu0 0.0
    %916 = vmatpush1.msra.mxu0 0.0
    %917 = vmatprep.subr.mxu0 0.0
    %918 = vmatpush1.msra.mxu0 0.0
    %919 = vmatprep.subr.mxu0 0.0
    %920 = vmatpush1.msra.mxu0 0.0
    %921 = vmatprep.subr.mxu0 0.0
    %922 = vmatpush1.msra.mxu0 0.0
    %923 = vmatprep.subr.mxu0 0.0
    %924 = vmatpush1.msra.mxu0 0.0
    %925 = vmatprep.subr.mxu0 0.0
    %926 = vmatpush1.msra.mxu0 0.0
    %927 = vmatprep.subr.mxu0 0.0
    %928 = vmatpush1.msra.mxu0 0.0
    %929 = vmatprep.mubr.f32.mxu0 0.0
    %930 = vmatmul.mubr.f32.gmra.mrb[0].mxu0 %v860
    %v931 = vpop.f32.mrb[0].mxu0
    %v932 = vadd.f32 %v857, %v931
    %v933 = vpop.f32.mrb[0].mxu0
    %934 = vmatprep.mubr.f32.mxu0 0.0
    %935 = vmatmul.mubr.f32.gmra.mrb[0].mxu0 %v863
    %v936 = vpop.f32.mrb[0].mxu0
    %v937 = vadd.f32 %v857, %v936
    %v938 = vpop.f32.mrb[0].mxu0
    %939 = vdwg.mxu0
    %v940 = vld [vmem:[#allocation4] sm:$0xff]
    %v941 = vld [vmem:[#allocation4 + $0x8] sm:$0xff]
    %v942 = vld [vmem:[#allocation4 + $0x10] sm:$0xff]
    %v943 = vld [vmem:[#allocation4 + $0x18] sm:$0xff]
    %v944 = vld [vmem:[%s43] sm:$0x1]
    %v946 = vlaneseq
    %v947 = vshrl.u32 %v946, 7
    %v948 = vsub.s32 0, %v947
    %v949 = vrot.slane %v944, %v948
    %951 = vmatprep.subr.mxu0 0.0
    %952 = vmatpush1.msra.mxu0 %v940
    %953 = vmatprep.subr.mxu0 0.0
    %954 = vmatpush1.msra.mxu0 %v941
    %955 = vmatprep.subr.mxu0 0.0
    %956 = vmatpush1.msra.mxu0 %v942
    %957 = vmatprep.subr.mxu0 0.0
    %958 = vmatpush1.msra.mxu0 %v943
    %959 = vmatprep.subr.mxu0 0.0
    %960 = vmatpush1.msra.mxu0 0.0
    %961 = vmatprep.subr.mxu0 0.0
    %962 = vmatpush1.msra.mxu0 0.0
    %963 = vmatprep.subr.mxu0 0.0
    %964 = vmatpush1.msra.mxu0 0.0
    %965 = vmatprep.subr.mxu0 0.0
    %966 = vmatpush1.msra.mxu0 0.0
    %967 = vmatprep.subr.mxu0 0.0
    %968 = vmatpush1.msra.mxu0 0.0
    %969 = vmatprep.subr.mxu0 0.0
    %970 = vmatpush1.msra.mxu0 0.0
    %971 = vmatprep.subr.mxu0 0.0
    %972 = vmatpush1.msra.mxu0 0.0
    %973 = vmatprep.subr.mxu0 0.0
    %974 = vmatpush1.msra.mxu0 0.0
    %975 = vmatprep.subr.mxu0 0.0
    %976 = vmatpush1.msra.mxu0 0.0
    %977 = vmatprep.subr.mxu0 0.0
    %978 = vmatpush1.msra.mxu0 0.0
    %979 = vmatprep.subr.mxu0 0.0
    %980 = vmatpush1.msra.mxu0 0.0
    %981 = vmatprep.subr.mxu0 0.0
    %982 = vmatpush1.msra.mxu0 0.0
    %983 = vmatprep.subr.mxu0 0.0
    %984 = vmatpush1.msra.mxu0 0.0
    %985 = vmatprep.subr.mxu0 0.0
    %986 = vmatpush1.msra.mxu0 0.0
    %987 = vmatprep.subr.mxu0 0.0
    %988 = vmatpush1.msra.mxu0 0.0
    %989 = vmatprep.subr.mxu0 0.0
    %990 = vmatpush1.msra.mxu0 0.0
    %991 = vmatprep.subr.mxu0 0.0
    %992 = vmatpush1.msra.mxu0 0.0
    %993 = vmatprep.subr.mxu0 0.0
    %994 = vmatpush1.msra.mxu0 0.0
    %995 = vmatprep.subr.mxu0 0.0
    %996 = vmatpush1.msra.mxu0 0.0
    %997 = vmatprep.subr.mxu0 0.0
    %998 = vmatpush1.msra.mxu0 0.0
    %999 = vmatprep.subr.mxu0 0.0
    %1000 = vmatpush1.msra.mxu0 0.0
    %1001 = vmatprep.subr.mxu0 0.0
    %1002 = vmatpush1.msra.mxu0 0.0
    %1003 = vmatprep.subr.mxu0 0.0
    %1004 = vmatpush1.msra.mxu0 0.0
    %1005 = vmatprep.subr.mxu0 0.0
    %1006 = vmatpush1.msra.mxu0 0.0
    %1007 = vmatprep.subr.mxu0 0.0
    %1008 = vmatpush1.msra.mxu0 0.0
    %1009 = vmatprep.subr.mxu0 0.0
    %1010 = vmatpush1.msra.mxu0 0.0
    %1011 = vmatprep.subr.mxu0 0.0
    %1012 = vmatpush1.msra.mxu0 0.0
    %1013 = vmatprep.subr.mxu0 0.0
    %1014 = vmatpush1.msra.mxu0 0.0
    %1015 = vmatprep.mubr.f32.mxu0 0.0
    %1016 = vmatmul.mubr.f32.gmra.mrb[0].mxu0 %v860
    %v1017 = vpop.f32.mrb[0].mxu0
    %v1018 = vadd.f32 %v949, %v1017
    %v1019 = vpop.f32.mrb[0].mxu0
    %1020 = vmatprep.mubr.f32.mxu0 0.0
    %1021 = vmatmul.mubr.f32.gmra.mrb[0].mxu0 %v863
    %v1022 = vpop.f32.mrb[0].mxu0
    %v1023 = vadd.f32 %v949, %v1022
    %v1024 = vpop.f32.mrb[0].mxu0
    %1025 = vdwg.mxu0
    %v1026 = vld [vmem:[%s7] sm:$0xff]
    %v1027 = vld [vmem:[%s7 + $0x8] sm:$0xff]
    %v1030 = vcombine.high %v932, %v932
    %v1032 = vunpack.c.l.s4 1966171168
    %v1033 = vunpack.c.0.s8 %v1032
    %v1034 = vlaneseq
    %v1035 = vshrl.u32 %v1034, 7
    %v1036 = vsub.s32 %v1033, %v1035
    %v1037 = vrot.slane %v932, %v1036
    %v1039 = vunpack.c.l.s4 1966171168
    %v1040 = vunpack.c.0.s8 %v1039
    %v1041 = vlaneseq
    %v1042 = vshrl.u32 %v1041, 7
    %v1043 = vsub.s32 %v1040, %v1042
    %v1044 = vrot.slane %v1030, %v1043
    %v1045 = vcombine.high %v1037, %v1037
    %v1046 = vcombine.high %v1044, %v1044
    %v1048 = vunpack.c.l.s4 1966171168
    %v1049 = vunpack.c.0.s8 %v1048
    %v1050 = vlaneseq
    %v1051 = vshrl.u32 %v1050, 7
    %v1052 = vsub.s32 %v1049, %v1051
    %v1053 = vrot.slane %v1037, %v1052
    %v1055 = vunpack.c.l.s4 1966171168
    %v1056 = vunpack.c.0.s8 %v1055
    %v1057 = vlaneseq
    %v1058 = vshrl.u32 %v1057, 7
    %v1059 = vsub.s32 %v1056, %v1058
    %v1060 = vrot.slane %v1044, %v1059
    %v1062 = vunpack.c.l.s4 1966171168
    %v1063 = vunpack.c.0.s8 %v1062
    %v1064 = vlaneseq
    %v1065 = vshrl.u32 %v1064, 7
    %v1066 = vsub.s32 %v1063, %v1065
    %v1067 = vrot.slane %v1045, %v1066
    %v1069 = vunpack.c.l.s4 1966171168
    %v1070 = vunpack.c.0.s8 %v1069
    %v1071 = vlaneseq
    %v1072 = vshrl.u32 %v1071, 7
    %v1073 = vsub.s32 %v1070, %v1072
    %v1074 = vrot.slane %v1046, %v1073
    %v1075 = vcombine.high %v1053, %v1053
    %v1076 = vcombine.high %v1060, %v1060
    %v1077 = vcombine.high %v1067, %v1067
    %v1078 = vcombine.high %v1074, %v1074
    %v1079 = vcombine.high %v937, %v937
    %v1081 = vunpack.c.l.s4 1966171168
    %v1082 = vunpack.c.0.s8 %v1081
    %v1083 = vlaneseq
    %v1084 = vshrl.u32 %v1083, 7
    %v1085 = vsub.s32 %v1082, %v1084
    %v1086 = vrot.slane %v937, %v1085
    %v1088 = vunpack.c.l.s4 1966171168
    %v1089 = vunpack.c.0.s8 %v1088
    %v1090 = vlaneseq
    %v1091 = vshrl.u32 %v1090, 7
    %v1092 = vsub.s32 %v1089, %v1091
    %v1093 = vrot.slane %v1079, %v1092
    %v1094 = vcombine.high %v1086, %v1086
    %v1095 = vcombine.high %v1093, %v1093
    %v1097 = vunpack.c.l.s4 1966171168
    %v1098 = vunpack.c.0.s8 %v1097
    %v1099 = vlaneseq
    %v1100 = vshrl.u32 %v1099, 7
    %v1101 = vsub.s32 %v1098, %v1100
    %v1102 = vrot.slane %v1086, %v1101
    %v1104 = vunpack.c.l.s4 1966171168
    %v1105 = vunpack.c.0.s8 %v1104
    %v1106 = vlaneseq
    %v1107 = vshrl.u32 %v1106, 7
    %v1108 = vsub.s32 %v1105, %v1107
    %v1109 = vrot.slane %v1093, %v1108
    %v1111 = vunpack.c.l.s4 1966171168
    %v1112 = vunpack.c.0.s8 %v1111
    %v1113 = vlaneseq
    %v1114 = vshrl.u32 %v1113, 7
    %v1115 = vsub.s32 %v1112, %v1114
    %v1116 = vrot.slane %v1094, %v1115
    %v1118 = vunpack.c.l.s4 1966171168
    %v1119 = vunpack.c.0.s8 %v1118
    %v1120 = vlaneseq
    %v1121 = vshrl.u32 %v1120, 7
    %v1122 = vsub.s32 %v1119, %v1121
    %v1123 = vrot.slane %v1095, %v1122
    %v1124 = vcombine.high %v1102, %v1102
    %v1125 = vcombine.high %v1109, %v1109
    %v1126 = vcombine.high %v1116, %v1116
    %v1127 = vcombine.high %v1123, %v1123
    %v1128 = vlaneseq
    %v1129 = vshrl.u32 %v1128, 7
    %v1130 = vsub.s32 0, %v1129
    %v1131 = vrot.slane %v1053, %v1130
    %v1132 = vlaneseq
    %v1133 = vshrl.u32 %v1132, 7
    %v1134 = vsub.s32 0, %v1133
    %v1135 = vrot.slane %v1067, %v1134
    %v1136 = vlaneseq
    %v1137 = vshrl.u32 %v1136, 7
    %v1138 = vsub.s32 0, %v1137
    %v1139 = vrot.slane %v1075, %v1138
    %v1140 = vlaneseq
    %v1141 = vshrl.u32 %v1140, 7
    %v1142 = vsub.s32 0, %v1141
    %v1143 = vrot.slane %v1077, %v1142
    %v1144 = vlaneseq
    %v1145 = vshrl.u32 %v1144, 7
    %v1146 = vsub.s32 0, %v1145
    %v1147 = vrot.slane %v1060, %v1146
    %v1148 = vlaneseq
    %v1149 = vshrl.u32 %v1148, 7
    %v1150 = vsub.s32 0, %v1149
    %v1151 = vrot.slane %v1074, %v1150
    %v1152 = vlaneseq
    %v1153 = vshrl.u32 %v1152, 7
    %v1154 = vsub.s32 0, %v1153
    %v1155 = vrot.slane %v1076, %v1154
    %v1156 = vlaneseq
    %v1157 = vshrl.u32 %v1156, 7
    %v1158 = vsub.s32 0, %v1157
    %v1159 = vrot.slane %v1078, %v1158
    %v1160 = vlaneseq
    %v1161 = vshrl.u32 %v1160, 7
    %v1162 = vsub.s32 0, %v1161
    %v1163 = vrot.slane %v1102, %v1162
    %v1164 = vlaneseq
    %v1165 = vshrl.u32 %v1164, 7
    %v1166 = vsub.s32 0, %v1165
    %v1167 = vrot.slane %v1116, %v1166
    %v1168 = vlaneseq
    %v1169 = vshrl.u32 %v1168, 7
    %v1170 = vsub.s32 0, %v1169
    %v1171 = vrot.slane %v1124, %v1170
    %v1172 = vlaneseq
    %v1173 = vshrl.u32 %v1172, 7
    %v1174 = vsub.s32 0, %v1173
    %v1175 = vrot.slane %v1126, %v1174
    %v1176 = vlaneseq
    %v1177 = vshrl.u32 %v1176, 7
    %v1178 = vsub.s32 0, %v1177
    %v1179 = vrot.slane %v1109, %v1178
    %v1180 = vlaneseq
    %v1181 = vshrl.u32 %v1180, 7
    %v1182 = vsub.s32 0, %v1181
    %v1183 = vrot.slane %v1123, %v1182
    %v1184 = vlaneseq
    %v1185 = vshrl.u32 %v1184, 7
    %v1186 = vsub.s32 0, %v1185
    %v1187 = vrot.slane %v1125, %v1186
    %v1188 = vlaneseq
    %v1189 = vshrl.u32 %v1188, 7
    %v1190 = vsub.s32 0, %v1189
    %v1191 = vrot.slane %v1127, %v1190
    %v1208 = vadd.f32 %v1131, %v1018
    %v1209 = vadd.f32 %v1135, %v1018
    %v1210 = vadd.f32 %v1139, %v1018
    %v1211 = vadd.f32 %v1143, %v1018
    %v1212 = vadd.f32 %v1147, %v1018
    %v1213 = vadd.f32 %v1151, %v1018
    %v1214 = vadd.f32 %v1155, %v1018
    %v1215 = vadd.f32 %v1159, %v1018
    %v1216 = vadd.f32 %v1163, %v1023
    %v1217 = vadd.f32 %v1167, %v1023
    %v1218 = vadd.f32 %v1171, %v1023
    %v1219 = vadd.f32 %v1175, %v1023
    %v1220 = vadd.f32 %v1179, %v1023
    %v1221 = vadd.f32 %v1183, %v1023
    %v1222 = vadd.f32 %v1187, %v1023
    %v1223 = vadd.f32 %v1191, %v1023
    %vm1224 = vcmp.gt.f32.partialorder %v1208, 0.0
    %vm1225 = vcmp.gt.f32.partialorder %v1209, 0.0
    %vm1226 = vcmp.gt.f32.partialorder %v1210, 0.0
    %vm1227 = vcmp.gt.f32.partialorder %v1211, 0.0
    %vm1228 = vcmp.gt.f32.partialorder %v1212, 0.0
    %vm1229 = vcmp.gt.f32.partialorder %v1213, 0.0
    %vm1230 = vcmp.gt.f32.partialorder %v1214, 0.0
    %vm1231 = vcmp.gt.f32.partialorder %v1215, 0.0
    %vm1232 = vcmp.gt.f32.partialorder %v1216, 0.0
    %vm1233 = vcmp.gt.f32.partialorder %v1217, 0.0
    %vm1234 = vcmp.gt.f32.partialorder %v1218, 0.0
    %vm1235 = vcmp.gt.f32.partialorder %v1219, 0.0
    %vm1236 = vcmp.gt.f32.partialorder %v1220, 0.0
    %vm1237 = vcmp.gt.f32.partialorder %v1221, 0.0
    %vm1238 = vcmp.gt.f32.partialorder %v1222, 0.0
    %vm1239 = vcmp.gt.f32.partialorder %v1223, 0.0
    %v1240 = vmin.f32 %v1208, 0.0
    %v1241 = vmin.f32 %v1209, 0.0
    %v1242 = vmin.f32 %v1210, 0.0
    %v1243 = vmin.f32 %v1211, 0.0
    %v1244 = vmin.f32 %v1212, 0.0
    %v1245 = vmin.f32 %v1213, 0.0
    %v1246 = vmin.f32 %v1214, 0.0
    %v1247 = vmin.f32 %v1215, 0.0
    %v1248 = vmin.f32 %v1216, 0.0
    %v1249 = vmin.f32 %v1217, 0.0
    %v1250 = vmin.f32 %v1218, 0.0
    %v1251 = vmin.f32 %v1219, 0.0
    %v1252 = vmin.f32 %v1220, 0.0
    %v1253 = vmin.f32 %v1221, 0.0
    %v1254 = vmin.f32 %v1222, 0.0
    %v1255 = vmin.f32 %v1223, 0.0
    %v1256 = vmul.f32 %v1240, 1.442695
    %v1257 = vpow.pop %v1256
    %v1258 = vmul.f32 %v1241, 1.442695
    %v1259 = vpow.pop %v1258
    %v1260 = vmul.f32 %v1242, 1.442695
    %v1261 = vpow.pop %v1260
    %v1262 = vmul.f32 %v1243, 1.442695
    %v1263 = vpow.pop %v1262
    %v1264 = vmul.f32 %v1244, 1.442695
    %v1265 = vpow.pop %v1264
    %v1266 = vmul.f32 %v1245, 1.442695
    %v1267 = vpow.pop %v1266
    %v1268 = vmul.f32 %v1246, 1.442695
    %v1269 = vpow.pop %v1268
    %v1270 = vmul.f32 %v1247, 1.442695
    %v1271 = vpow.pop %v1270
    %v1272 = vmul.f32 %v1248, 1.442695
    %v1273 = vpow.pop %v1272
    %v1274 = vmul.f32 %v1249, 1.442695
    %v1275 = vpow.pop %v1274
    %v1276 = vmul.f32 %v1250, 1.442695
    %v1277 = vpow.pop %v1276
    %v1278 = vmul.f32 %v1251, 1.442695
    %v1279 = vpow.pop %v1278
    %v1280 = vmul.f32 %v1252, 1.442695
    %v1281 = vpow.pop %v1280
    %v1282 = vmul.f32 %v1253, 1.442695
    %v1283 = vpow.pop %v1282
    %v1284 = vmul.f32 %v1254, 1.442695
    %v1285 = vpow.pop %v1284
    %v1286 = vmul.f32 %v1255, 1.442695
    %v1287 = vpow.pop %v1286
    %v1288 = vsub.f32 %v1257, 1.0
    %v1289 = vsub.f32 %v1259, 1.0
    %v1290 = vsub.f32 %v1261, 1.0
    %v1291 = vsub.f32 %v1263, 1.0
    %v1292 = vsub.f32 %v1265, 1.0
    %v1293 = vsub.f32 %v1267, 1.0
    %v1294 = vsub.f32 %v1269, 1.0
    %v1295 = vsub.f32 %v1271, 1.0
    %v1296 = vsub.f32 %v1273, 1.0
    %v1297 = vsub.f32 %v1275, 1.0
    %v1298 = vsub.f32 %v1277, 1.0
    %v1299 = vsub.f32 %v1279, 1.0
    %v1300 = vsub.f32 %v1281, 1.0
    %v1301 = vsub.f32 %v1283, 1.0
    %v1302 = vsub.f32 %v1285, 1.0
    %v1303 = vsub.f32 %v1287, 1.0
    %v1304 = vsel %vm1224, %v1208, %v1288
    %v1305 = vsel %vm1225, %v1209, %v1289
    %v1306 = vsel %vm1226, %v1210, %v1290
    %v1307 = vsel %vm1227, %v1211, %v1291
    %v1308 = vsel %vm1228, %v1212, %v1292
    %v1309 = vsel %vm1229, %v1213, %v1293
    %v1310 = vsel %vm1230, %v1214, %v1294
    %v1311 = vsel %vm1231, %v1215, %v1295
    %v1312 = vsel %vm1232, %v1216, %v1296
    %v1313 = vsel %vm1233, %v1217, %v1297
    %v1314 = vsel %vm1234, %v1218, %v1298
    %v1315 = vsel %vm1235, %v1219, %v1299
    %v1316 = vsel %vm1236, %v1220, %v1300
    %v1317 = vsel %vm1237, %v1221, %v1301
    %v1318 = vsel %vm1238, %v1222, %v1302
    %v1319 = vsel %vm1239, %v1223, %v1303
    %1321 = vset.pattern.permute.xlu0 0
    %1322 = vperm.xlu0 %1321, %v1026
    %v1323 = vpop.permute.xlu0 %1322
    %1326 = vset.pattern.permute.xlu0 0
    %1327 = vperm.xlu0 %1326, %v1027
    %v1328 = vpop.permute.xlu0 %1327
    %v1330 = vadd.f32 %v1304, %v1323
    %v1331 = vadd.f32 %v1305, %v1323
    %v1332 = vadd.f32 %v1306, %v1323
    %v1333 = vadd.f32 %v1307, %v1323
    %v1334 = vadd.f32 %v1308, %v1323
    %v1335 = vadd.f32 %v1309, %v1323
    %v1336 = vadd.f32 %v1310, %v1323
    %v1337 = vadd.f32 %v1311, %v1323
    %v1338 = vadd.f32 %v1312, %v1328
    %v1339 = vadd.f32 %v1313, %v1328
    %v1340 = vadd.f32 %v1314, %v1328
    %v1341 = vadd.f32 %v1315, %v1328
    %v1342 = vadd.f32 %v1316, %v1328
    %v1343 = vadd.f32 %v1317, %v1328
    %v1344 = vadd.f32 %v1318, %v1328
    %v1345 = vadd.f32 %v1319, %v1328
    %v1346 = vsel %vm214, %v1330, -inf
    %v1347 = vrot.slane %v1346, 4
    %v1348 = vmax.f32 %v1346, %v1347
    %v1349 = vrot.slane %v1348, 2
    %v1350 = vmax.f32 %v1348, %v1349
    %v1351 = vrot.slane %v1350, 1
    %v1352 = vmax.f32 %v1350, %v1351
    %v1353 = vsel %vm214, %v1331, -inf
    %v1354 = vrot.slane %v1353, 4
    %v1355 = vmax.f32 %v1353, %v1354
    %v1356 = vrot.slane %v1355, 2
    %v1357 = vmax.f32 %v1355, %v1356
    %v1358 = vrot.slane %v1357, 1
    %v1359 = vmax.f32 %v1357, %v1358
    %v1360 = vsel %vm214, %v1332, -inf
    %v1361 = vrot.slane %v1360, 4
    %v1362 = vmax.f32 %v1360, %v1361
    %v1363 = vrot.slane %v1362, 2
    %v1364 = vmax.f32 %v1362, %v1363
    %v1365 = vrot.slane %v1364, 1
    %v1366 = vmax.f32 %v1364, %v1365
    %v1367 = vsel %vm214, %v1333, -inf
    %v1368 = vrot.slane %v1367, 4
    %v1369 = vmax.f32 %v1367, %v1368
    %v1370 = vrot.slane %v1369, 2
    %v1371 = vmax.f32 %v1369, %v1370
    %v1372 = vrot.slane %v1371, 1
    %v1373 = vmax.f32 %v1371, %v1372
    %v1374 = vsel %vm214, %v1334, -inf
    %v1375 = vrot.slane %v1374, 4
    %v1376 = vmax.f32 %v1374, %v1375
    %v1377 = vrot.slane %v1376, 2
    %v1378 = vmax.f32 %v1376, %v1377
    %v1379 = vrot.slane %v1378, 1
    %v1380 = vmax.f32 %v1378, %v1379
    %v1381 = vsel %vm214, %v1335, -inf
    %v1382 = vrot.slane %v1381, 4
    %v1383 = vmax.f32 %v1381, %v1382
    %v1384 = vrot.slane %v1383, 2
    %v1385 = vmax.f32 %v1383, %v1384
    %v1386 = vrot.slane %v1385, 1
    %v1387 = vmax.f32 %v1385, %v1386
    %v1388 = vsel %vm214, %v1336, -inf
    %v1389 = vrot.slane %v1388, 4
    %v1390 = vmax.f32 %v1388, %v1389
    %v1391 = vrot.slane %v1390, 2
    %v1392 = vmax.f32 %v1390, %v1391
    %v1393 = vrot.slane %v1392, 1
    %v1394 = vmax.f32 %v1392, %v1393
    %v1395 = vsel %vm214, %v1337, -inf
    %v1396 = vrot.slane %v1395, 4
    %v1397 = vmax.f32 %v1395, %v1396
    %v1398 = vrot.slane %v1397, 2
    %v1399 = vmax.f32 %v1397, %v1398
    %v1400 = vrot.slane %v1399, 1
    %v1401 = vmax.f32 %v1399, %v1400
    %v1402 = vsel %vm214, %v1338, -inf
    %v1403 = vrot.slane %v1402, 4
    %v1404 = vmax.f32 %v1402, %v1403
    %v1405 = vrot.slane %v1404, 2
    %v1406 = vmax.f32 %v1404, %v1405
    %v1407 = vrot.slane %v1406, 1
    %v1408 = vmax.f32 %v1406, %v1407
    %v1409 = vsel %vm214, %v1339, -inf
    %v1410 = vrot.slane %v1409, 4
    %v1411 = vmax.f32 %v1409, %v1410
    %v1412 = vrot.slane %v1411, 2
    %v1413 = vmax.f32 %v1411, %v1412
    %v1414 = vrot.slane %v1413, 1
    %v1415 = vmax.f32 %v1413, %v1414
    %v1416 = vsel %vm214, %v1340, -inf
    %v1417 = vrot.slane %v1416, 4
    %v1418 = vmax.f32 %v1416, %v1417
    %v1419 = vrot.slane %v1418, 2
    %v1420 = vmax.f32 %v1418, %v1419
    %v1421 = vrot.slane %v1420, 1
    %v1422 = vmax.f32 %v1420, %v1421
    %v1423 = vsel %vm214, %v1341, -inf
    %v1424 = vrot.slane %v1423, 4
    %v1425 = vmax.f32 %v1423, %v1424
    %v1426 = vrot.slane %v1425, 2
    %v1427 = vmax.f32 %v1425, %v1426
    %v1428 = vrot.slane %v1427, 1
    %v1429 = vmax.f32 %v1427, %v1428
    %v1430 = vsel %vm214, %v1342, -inf
    %v1431 = vrot.slane %v1430, 4
    %v1432 = vmax.f32 %v1430, %v1431
    %v1433 = vrot.slane %v1432, 2
    %v1434 = vmax.f32 %v1432, %v1433
    %v1435 = vrot.slane %v1434, 1
    %v1436 = vmax.f32 %v1434, %v1435
    %v1437 = vsel %vm214, %v1343, -inf
    %v1438 = vrot.slane %v1437, 4
    %v1439 = vmax.f32 %v1437, %v1438
    %v1440 = vrot.slane %v1439, 2
    %v1441 = vmax.f32 %v1439, %v1440
    %v1442 = vrot.slane %v1441, 1
    %v1443 = vmax.f32 %v1441, %v1442
    %v1444 = vsel %vm214, %v1344, -inf
    %v1445 = vrot.slane %v1444, 4
    %v1446 = vmax.f32 %v1444, %v1445
    %v1447 = vrot.slane %v1446, 2
    %v1448 = vmax.f32 %v1446, %v1447
    %v1449 = vrot.slane %v1448, 1
    %v1450 = vmax.f32 %v1448, %v1449
    %v1451 = vsel %vm214, %v1345, -inf
    %v1452 = vrot.slane %v1451, 4
    %v1453 = vmax.f32 %v1451, %v1452
    %v1454 = vrot.slane %v1453, 2
    %v1455 = vmax.f32 %v1453, %v1454
    %v1456 = vrot.slane %v1455, 1
    %v1457 = vmax.f32 %v1455, %v1456
    %v1458 = vsub.f32 %v1330, %v1352
    %v1459 = vsub.f32 %v1331, %v1359
    %v1460 = vsub.f32 %v1332, %v1366
    %v1461 = vsub.f32 %v1333, %v1373
    %v1462 = vsub.f32 %v1334, %v1380
    %v1463 = vsub.f32 %v1335, %v1387
    %v1464 = vsub.f32 %v1336, %v1394
    %v1465 = vsub.f32 %v1337, %v1401
    %v1466 = vsub.f32 %v1338, %v1408
    %v1467 = vsub.f32 %v1339, %v1415
    %v1468 = vsub.f32 %v1340, %v1422
    %v1469 = vsub.f32 %v1341, %v1429
    %v1470 = vsub.f32 %v1342, %v1436
    %v1471 = vsub.f32 %v1343, %v1443
    %v1472 = vsub.f32 %v1344, %v1450
    %v1473 = vsub.f32 %v1345, %v1457
    %v1474 = vmul.f32 %v1458, 1.442695
    %v1475 = vpow.pop %v1474
    %v1476 = vmul.f32 %v1459, 1.442695
    %v1477 = vpow.pop %v1476
    %v1478 = vmul.f32 %v1460, 1.442695
    %v1479 = vpow.pop %v1478
    %v1480 = vmul.f32 %v1461, 1.442695
    %v1481 = vpow.pop %v1480
    %v1482 = vmul.f32 %v1462, 1.442695
    %v1483 = vpow.pop %v1482
    %v1484 = vmul.f32 %v1463, 1.442695
    %v1485 = vpow.pop %v1484
    %v1486 = vmul.f32 %v1464, 1.442695
    %v1487 = vpow.pop %v1486
    %v1488 = vmul.f32 %v1465, 1.442695
    %v1489 = vpow.pop %v1488
    %v1490 = vmul.f32 %v1466, 1.442695
    %v1491 = vpow.pop %v1490
    %v1492 = vmul.f32 %v1467, 1.442695
    %v1493 = vpow.pop %v1492
    %v1494 = vmul.f32 %v1468, 1.442695
    %v1495 = vpow.pop %v1494
    %v1496 = vmul.f32 %v1469, 1.442695
    %v1497 = vpow.pop %v1496
    %v1498 = vmul.f32 %v1470, 1.442695
    %v1499 = vpow.pop %v1498
    %v1500 = vmul.f32 %v1471, 1.442695
    %v1501 = vpow.pop %v1500
    %v1502 = vmul.f32 %v1472, 1.442695
    %v1503 = vpow.pop %v1502
    %v1504 = vmul.f32 %v1473, 1.442695
    %v1505 = vpow.pop %v1504
    %v1506 = vsel %vm214, %v1475, 0.0
    %v1507 = vrot.slane %v1506, 4
    %v1508 = vadd.f32 %v1506, %v1507
    %v1509 = vrot.slane %v1508, 2
    %v1510 = vadd.f32 %v1508, %v1509
    %v1511 = vrot.slane %v1510, 1
    %v1512 = vadd.f32 %v1510, %v1511
    %v1513 = vsel %vm214, %v1477, 0.0
    %v1514 = vrot.slane %v1513, 4
    %v1515 = vadd.f32 %v1513, %v1514
    %v1516 = vrot.slane %v1515, 2
    %v1517 = vadd.f32 %v1515, %v1516
    %v1518 = vrot.slane %v1517, 1
    %v1519 = vadd.f32 %v1517, %v1518
    %v1520 = vsel %vm214, %v1479, 0.0
    %v1521 = vrot.slane %v1520, 4
    %v1522 = vadd.f32 %v1520, %v1521
    %v1523 = vrot.slane %v1522, 2
    %v1524 = vadd.f32 %v1522, %v1523
    %v1525 = vrot.slane %v1524, 1
    %v1526 = vadd.f32 %v1524, %v1525
    %v1527 = vsel %vm214, %v1481, 0.0
    %v1528 = vrot.slane %v1527, 4
    %v1529 = vadd.f32 %v1527, %v1528
    %v1530 = vrot.slane %v1529, 2
    %v1531 = vadd.f32 %v1529, %v1530
    %v1532 = vrot.slane %v1531, 1
    %v1533 = vadd.f32 %v1531, %v1532
    %v1534 = vsel %vm214, %v1483, 0.0
    %v1535 = vrot.slane %v1534, 4
    %v1536 = vadd.f32 %v1534, %v1535
    %v1537 = vrot.slane %v1536, 2
    %v1538 = vadd.f32 %v1536, %v1537
    %v1539 = vrot.slane %v1538, 1
    %v1540 = vadd.f32 %v1538, %v1539
    %v1541 = vsel %vm214, %v1485, 0.0
    %v1542 = vrot.slane %v1541, 4
    %v1543 = vadd.f32 %v1541, %v1542
    %v1544 = vrot.slane %v1543, 2
    %v1545 = vadd.f32 %v1543, %v1544
    %v1546 = vrot.slane %v1545, 1
    %v1547 = vadd.f32 %v1545, %v1546
    %v1548 = vsel %vm214, %v1487, 0.0
    %v1549 = vrot.slane %v1548, 4
    %v1550 = vadd.f32 %v1548, %v1549
    %v1551 = vrot.slane %v1550, 2
    %v1552 = vadd.f32 %v1550, %v1551
    %v1553 = vrot.slane %v1552, 1
    %v1554 = vadd.f32 %v1552, %v1553
    %v1555 = vsel %vm214, %v1489, 0.0
    %v1556 = vrot.slane %v1555, 4
    %v1557 = vadd.f32 %v1555, %v1556
    %v1558 = vrot.slane %v1557, 2
    %v1559 = vadd.f32 %v1557, %v1558
    %v1560 = vrot.slane %v1559, 1
    %v1561 = vadd.f32 %v1559, %v1560
    %v1562 = vsel %vm214, %v1491, 0.0
    %v1563 = vrot.slane %v1562, 4
    %v1564 = vadd.f32 %v1562, %v1563
    %v1565 = vrot.slane %v1564, 2
    %v1566 = vadd.f32 %v1564, %v1565
    %v1567 = vrot.slane %v1566, 1
    %v1568 = vadd.f32 %v1566, %v1567
    %v1569 = vsel %vm214, %v1493, 0.0
    %v1570 = vrot.slane %v1569, 4
    %v1571 = vadd.f32 %v1569, %v1570
    %v1572 = vrot.slane %v1571, 2
    %v1573 = vadd.f32 %v1571, %v1572
    %v1574 = vrot.slane %v1573, 1
    %v1575 = vadd.f32 %v1573, %v1574
    %v1576 = vsel %vm214, %v1495, 0.0
    %v1577 = vrot.slane %v1576, 4
    %v1578 = vadd.f32 %v1576, %v1577
    %v1579 = vrot.slane %v1578, 2
    %v1580 = vadd.f32 %v1578, %v1579
    %v1581 = vrot.slane %v1580, 1
    %v1582 = vadd.f32 %v1580, %v1581
    %v1583 = vsel %vm214, %v1497, 0.0
    %v1584 = vrot.slane %v1583, 4
    %v1585 = vadd.f32 %v1583, %v1584
    %v1586 = vrot.slane %v1585, 2
    %v1587 = vadd.f32 %v1585, %v1586
    %v1588 = vrot.slane %v1587, 1
    %v1589 = vadd.f32 %v1587, %v1588
    %v1590 = vsel %vm214, %v1499, 0.0
    %v1591 = vrot.slane %v1590, 4
    %v1592 = vadd.f32 %v1590, %v1591
    %v1593 = vrot.slane %v1592, 2
    %v1594 = vadd.f32 %v1592, %v1593
    %v1595 = vrot.slane %v1594, 1
    %v1596 = vadd.f32 %v1594, %v1595
    %v1597 = vsel %vm214, %v1501, 0.0
    %v1598 = vrot.slane %v1597, 4
    %v1599 = vadd.f32 %v1597, %v1598
    %v1600 = vrot.slane %v1599, 2
    %v1601 = vadd.f32 %v1599, %v1600
    %v1602 = vrot.slane %v1601, 1
    %v1603 = vadd.f32 %v1601, %v1602
    %v1604 = vsel %vm214, %v1503, 0.0
    %v1605 = vrot.slane %v1604, 4
    %v1606 = vadd.f32 %v1604, %v1605
    %v1607 = vrot.slane %v1606, 2
    %v1608 = vadd.f32 %v1606, %v1607
    %v1609 = vrot.slane %v1608, 1
    %v1610 = vadd.f32 %v1608, %v1609
    %v1611 = vsel %vm214, %v1505, 0.0
    %v1612 = vrot.slane %v1611, 4
    %v1613 = vadd.f32 %v1611, %v1612
    %v1614 = vrot.slane %v1613, 2
    %v1615 = vadd.f32 %v1613, %v1614
    %v1616 = vrot.slane %v1615, 1
    %v1617 = vadd.f32 %v1615, %v1616
    %v1618 = vrcp.pop %v1512
    %v1619 = vrcp.pop %v1519
    %v1620 = vrcp.pop %v1526
    %v1621 = vrcp.pop %v1533
    %v1622 = vrcp.pop %v1540
    %v1623 = vrcp.pop %v1547
    %v1624 = vrcp.pop %v1554
    %v1625 = vrcp.pop %v1561
    %v1626 = vrcp.pop %v1568
    %v1627 = vrcp.pop %v1575
    %v1628 = vrcp.pop %v1582
    %v1629 = vrcp.pop %v1589
    %v1630 = vrcp.pop %v1596
    %v1631 = vrcp.pop %v1603
    %v1632 = vrcp.pop %v1610
    %v1633 = vrcp.pop %v1617
    %v1634 = vmul.f32 %v1475, %v1618
    %v1635 = vmul.f32 %v1477, %v1619
    %v1636 = vmul.f32 %v1479, %v1620
    %v1637 = vmul.f32 %v1481, %v1621
    %v1638 = vmul.f32 %v1483, %v1622
    %v1639 = vmul.f32 %v1485, %v1623
    %v1640 = vmul.f32 %v1487, %v1624
    %v1641 = vmul.f32 %v1489, %v1625
    %v1642 = vmul.f32 %v1491, %v1626
    %v1643 = vmul.f32 %v1493, %v1627
    %v1644 = vmul.f32 %v1495, %v1628
    %v1645 = vmul.f32 %v1497, %v1629
    %v1646 = vmul.f32 %v1499, %v1630
    %v1647 = vmul.f32 %v1501, %v1631
    %v1648 = vmul.f32 %v1503, %v1632
    %v1649 = vmul.f32 %v1505, %v1633
    %v1650 = vmul.f32 %v1634, %v846
    %v1651 = vmul.f32 %v1635, %v846
    %v1652 = vmul.f32 %v1636, %v846
    %v1653 = vmul.f32 %v1637, %v846
    %v1654 = vmul.f32 %v1638, %v846
    %v1655 = vmul.f32 %v1639, %v846
    %v1656 = vmul.f32 %v1640, %v846
    %v1657 = vmul.f32 %v1641, %v846
    %v1658 = vmul.f32 %v1642, %v847
    %v1659 = vmul.f32 %v1643, %v847
    %v1660 = vmul.f32 %v1644, %v847
    %v1661 = vmul.f32 %v1645, %v847
    %v1662 = vmul.f32 %v1646, %v847
    %v1663 = vmul.f32 %v1647, %v847
    %v1664 = vmul.f32 %v1648, %v847
    %v1665 = vmul.f32 %v1649, %v847
    %v1666 = vsel %vm214, %v1650, 0.0
    %v1667 = vrot.slane %v1666, 4
    %v1668 = vadd.f32 %v1666, %v1667
    %v1669 = vrot.slane %v1668, 2
    %v1670 = vadd.f32 %v1668, %v1669
    %v1671 = vrot.slane %v1670, 1
    %v1672 = vadd.f32 %v1670, %v1671
    %v1673 = vsel %vm214, %v1651, 0.0
    %v1674 = vrot.slane %v1673, 4
    %v1675 = vadd.f32 %v1673, %v1674
    %v1676 = vrot.slane %v1675, 2
    %v1677 = vadd.f32 %v1675, %v1676
    %v1678 = vrot.slane %v1677, 1
    %v1679 = vadd.f32 %v1677, %v1678
    %v1680 = vsel %vm214, %v1652, 0.0
    %v1681 = vrot.slane %v1680, 4
    %v1682 = vadd.f32 %v1680, %v1681
    %v1683 = vrot.slane %v1682, 2
    %v1684 = vadd.f32 %v1682, %v1683
    %v1685 = vrot.slane %v1684, 1
    %v1686 = vadd.f32 %v1684, %v1685
    %v1687 = vsel %vm214, %v1653, 0.0
    %v1688 = vrot.slane %v1687, 4
    %v1689 = vadd.f32 %v1687, %v1688
    %v1690 = vrot.slane %v1689, 2
    %v1691 = vadd.f32 %v1689, %v1690
    %v1692 = vrot.slane %v1691, 1
    %v1693 = vadd.f32 %v1691, %v1692
    %v1694 = vsel %vm214, %v1654, 0.0
    %v1695 = vrot.slane %v1694, 4
    %v1696 = vadd.f32 %v1694, %v1695
    %v1697 = vrot.slane %v1696, 2
    %v1698 = vadd.f32 %v1696, %v1697
    %v1699 = vrot.slane %v1698, 1
    %v1700 = vadd.f32 %v1698, %v1699
    %v1701 = vsel %vm214, %v1655, 0.0
    %v1702 = vrot.slane %v1701, 4
    %v1703 = vadd.f32 %v1701, %v1702
    %v1704 = vrot.slane %v1703, 2
    %v1705 = vadd.f32 %v1703, %v1704
    %v1706 = vrot.slane %v1705, 1
    %v1707 = vadd.f32 %v1705, %v1706
    %v1708 = vsel %vm214, %v1656, 0.0
    %v1709 = vrot.slane %v1708, 4
    %v1710 = vadd.f32 %v1708, %v1709
    %v1711 = vrot.slane %v1710, 2
    %v1712 = vadd.f32 %v1710, %v1711
    %v1713 = vrot.slane %v1712, 1
    %v1714 = vadd.f32 %v1712, %v1713
    %v1715 = vsel %vm214, %v1657, 0.0
    %v1716 = vrot.slane %v1715, 4
    %v1717 = vadd.f32 %v1715, %v1716
    %v1718 = vrot.slane %v1717, 2
    %v1719 = vadd.f32 %v1717, %v1718
    %v1720 = vrot.slane %v1719, 1
    %v1721 = vadd.f32 %v1719, %v1720
    %v1722 = vsel %vm214, %v1658, 0.0
    %v1723 = vrot.slane %v1722, 4
    %v1724 = vadd.f32 %v1722, %v1723
    %v1725 = vrot.slane %v1724, 2
    %v1726 = vadd.f32 %v1724, %v1725
    %v1727 = vrot.slane %v1726, 1
    %v1728 = vadd.f32 %v1726, %v1727
    %v1729 = vsel %vm214, %v1659, 0.0
    %v1730 = vrot.slane %v1729, 4
    %v1731 = vadd.f32 %v1729, %v1730
    %v1732 = vrot.slane %v1731, 2
    %v1733 = vadd.f32 %v1731, %v1732
    %v1734 = vrot.slane %v1733, 1
    %v1735 = vadd.f32 %v1733, %v1734
    %v1736 = vsel %vm214, %v1660, 0.0
    %v1737 = vrot.slane %v1736, 4
    %v1738 = vadd.f32 %v1736, %v1737
    %v1739 = vrot.slane %v1738, 2
    %v1740 = vadd.f32 %v1738, %v1739
    %v1741 = vrot.slane %v1740, 1
    %v1742 = vadd.f32 %v1740, %v1741
    %v1743 = vsel %vm214, %v1661, 0.0
    %v1744 = vrot.slane %v1743, 4
    %v1745 = vadd.f32 %v1743, %v1744
    %v1746 = vrot.slane %v1745, 2
    %v1747 = vadd.f32 %v1745, %v1746
    %v1748 = vrot.slane %v1747, 1
    %v1749 = vadd.f32 %v1747, %v1748
    %v1750 = vsel %vm214, %v1662, 0.0
    %v1751 = vrot.slane %v1750, 4
    %v1752 = vadd.f32 %v1750, %v1751
    %v1753 = vrot.slane %v1752, 2
    %v1754 = vadd.f32 %v1752, %v1753
    %v1755 = vrot.slane %v1754, 1
    %v1756 = vadd.f32 %v1754, %v1755
    %v1757 = vsel %vm214, %v1663, 0.0
    %v1758 = vrot.slane %v1757, 4
    %v1759 = vadd.f32 %v1757, %v1758
    %v1760 = vrot.slane %v1759, 2
    %v1761 = vadd.f32 %v1759, %v1760
    %v1762 = vrot.slane %v1761, 1
    %v1763 = vadd.f32 %v1761, %v1762
    %v1764 = vsel %vm214, %v1664, 0.0
    %v1765 = vrot.slane %v1764, 4
    %v1766 = vadd.f32 %v1764, %v1765
    %v1767 = vrot.slane %v1766, 2
    %v1768 = vadd.f32 %v1766, %v1767
    %v1769 = vrot.slane %v1768, 1
    %v1770 = vadd.f32 %v1768, %v1769
    %v1771 = vsel %vm214, %v1665, 0.0
    %v1772 = vrot.slane %v1771, 4
    %v1773 = vadd.f32 %v1771, %v1772
    %v1774 = vrot.slane %v1773, 2
    %v1775 = vadd.f32 %v1773, %v1774
    %v1776 = vrot.slane %v1775, 1
    %v1777 = vadd.f32 %v1775, %v1776
    %v1778 = vld [vmem:[#allocation6] sm:$0xff]
    %v1779 = vld [vmem:[#allocation6 + $0x8] sm:$0xff]
    %v1780 = vld [vmem:[#allocation6 + $0x10] sm:$0xff]
    %v1781 = vld [vmem:[#allocation6 + $0x18] sm:$0xff]
    %v1782 = vld [vmem:[%s47] sm:$0x1]
    %v1784 = vlaneseq
    %v1785 = vshrl.u32 %v1784, 7
    %v1786 = vsub.s32 0, %v1785
    %v1787 = vrot.slane %v1782, %v1786
    %vm1805 = vcmask 1041409
    %v1806 = vsel %vm1805, %v1679, %v1672
    %vm1807 = vcmask 1042434
    %v1808 = vsel %vm1807, %v1686, %v1806
    %vm1809 = vcmask 1043459
    %v1810 = vsel %vm1809, %v1693, %v1808
    %vm1811 = vcmask 1044484
    %v1812 = vsel %vm1811, %v1700, %v1810
    %vm1813 = vcmask 1045509
    %v1814 = vsel %vm1813, %v1707, %v1812
    %vm1815 = vcmask 1046534
    %v1816 = vsel %vm1815, %v1714, %v1814
    %vm1817 = vcmask 1047559
    %v1818 = vsel %vm1817, %v1721, %v1816
    %v1819 = vsel %vm1805, %v1735, %v1728
    %v1820 = vsel %vm1807, %v1742, %v1819
    %v1821 = vsel %vm1809, %v1749, %v1820
    %v1822 = vsel %vm1811, %v1756, %v1821
    %v1823 = vsel %vm1813, %v1763, %v1822
    %v1824 = vsel %vm1815, %v1770, %v1823
    %v1825 = vsel %vm1817, %v1777, %v1824
    %v1826 = vsel %vm214, %v1818, 0
    %v1828 = vsel %vm214, %v1825, 0
    %1830 = vmatprep.subr.mxu0 0.0
    %1831 = vmatpush1.msra.mxu0 %v1778
    %1832 = vmatprep.subr.mxu0 0.0
    %1833 = vmatpush1.msra.mxu0 %v1779
    %1834 = vmatprep.subr.mxu0 0.0
    %1835 = vmatpush1.msra.mxu0 %v1780
    %1836 = vmatprep.subr.mxu0 0.0
    %1837 = vmatpush1.msra.mxu0 %v1781
    %1838 = vmatprep.subr.mxu0 0.0
    %1839 = vmatpush1.msra.mxu0 0.0
    %1840 = vmatprep.subr.mxu0 0.0
    %1841 = vmatpush1.msra.mxu0 0.0
    %1842 = vmatprep.subr.mxu0 0.0
    %1843 = vmatpush1.msra.mxu0 0.0
    %1844 = vmatprep.subr.mxu0 0.0
    %1845 = vmatpush1.msra.mxu0 0.0
    %1846 = vmatprep.subr.mxu0 0.0
    %1847 = vmatpush1.msra.mxu0 0.0
    %1848 = vmatprep.subr.mxu0 0.0
    %1849 = vmatpush1.msra.mxu0 0.0
    %1850 = vmatprep.subr.mxu0 0.0
    %1851 = vmatpush1.msra.mxu0 0.0
    %1852 = vmatprep.subr.mxu0 0.0
    %1853 = vmatpush1.msra.mxu0 0.0
    %1854 = vmatprep.subr.mxu0 0.0
    %1855 = vmatpush1.msra.mxu0 0.0
    %1856 = vmatprep.subr.mxu0 0.0
    %1857 = vmatpush1.msra.mxu0 0.0
    %1858 = vmatprep.subr.mxu0 0.0
    %1859 = vmatpush1.msra.mxu0 0.0
    %1860 = vmatprep.subr.mxu0 0.0
    %1861 = vmatpush1.msra.mxu0 0.0
    %1862 = vmatprep.subr.mxu0 0.0
    %1863 = vmatpush1.msra.mxu0 0.0
    %1864 = vmatprep.subr.mxu0 0.0
    %1865 = vmatpush1.msra.mxu0 0.0
    %1866 = vmatprep.subr.mxu0 0.0
    %1867 = vmatpush1.msra.mxu0 0.0
    %1868 = vmatprep.subr.mxu0 0.0
    %1869 = vmatpush1.msra.mxu0 0.0
    %1870 = vmatprep.subr.mxu0 0.0
    %1871 = vmatpush1.msra.mxu0 0.0
    %1872 = vmatprep.subr.mxu0 0.0
    %1873 = vmatpush1.msra.mxu0 0.0
    %1874 = vmatprep.subr.mxu0 0.0
    %1875 = vmatpush1.msra.mxu0 0.0
    %1876 = vmatprep.subr.mxu0 0.0
    %1877 = vmatpush1.msra.mxu0 0.0
    %1878 = vmatprep.subr.mxu0 0.0
    %1879 = vmatpush1.msra.mxu0 0.0
    %1880 = vmatprep.subr.mxu0 0.0
    %1881 = vmatpush1.msra.mxu0 0.0
    %1882 = vmatprep.subr.mxu0 0.0
    %1883 = vmatpush1.msra.mxu0 0.0
    %1884 = vmatprep.subr.mxu0 0.0
    %1885 = vmatpush1.msra.mxu0 0.0
    %1886 = vmatprep.subr.mxu0 0.0
    %1887 = vmatpush1.msra.mxu0 0.0
    %1888 = vmatprep.subr.mxu0 0.0
    %1889 = vmatpush1.msra.mxu0 0.0
    %1890 = vmatprep.subr.mxu0 0.0
    %1891 = vmatpush1.msra.mxu0 0.0
    %1892 = vmatprep.subr.mxu0 0.0
    %1893 = vmatpush1.msra.mxu0 0.0
    %1894 = vmatprep.mubr.f32.mxu0 0.0
    %1895 = vmatmul.mubr.f32.gmra.mrb[0].mxu0 %v1826
    %v1896 = vpop.f32.mrb[0].mxu0
    %v1897 = vadd.f32 %v1787, %v1896
    %v1898 = vpop.f32.mrb[0].mxu0
    %1899 = vmatprep.mubr.f32.mxu0 0.0
    %1900 = vmatmul.mubr.f32.gmra.mrb[0].mxu0 %v1828
    %v1901 = vpop.f32.mrb[0].mxu0
    %v1902 = vadd.f32 %v1787, %v1901
    %v1903 = vpop.f32.mrb[0].mxu0
    %1904 = vdwg.mxu0
    %v1905 = vtanh.pop %v1897
    %v1906 = vtanh.pop %v1902
    %v1907 = vld [vmem:[#allocation7] sm:$0xff]
    %v1908 = vld [vmem:[#allocation7 + $0x8] sm:$0xff]
    %v1909 = vld [vmem:[#allocation7 + $0x10] sm:$0xff]
    %v1910 = vld [vmem:[#allocation7 + $0x18] sm:$0xff]
    %v1911 = vld [vmem:[%s51] sm:$0x1]
    %v1913 = vlaneseq
    %v1914 = vshrl.u32 %v1913, 7
    %v1915 = vsub.s32 0, %v1914
    %v1916 = vrot.slane %v1911, %v1915
    %1918 = vmatprep.subr.mxu0 0.0
    %1919 = vmatpush1.msra.mxu0 %v1907
    %1920 = vmatprep.subr.mxu0 0.0
    %1921 = vmatpush1.msra.mxu0 %v1908
    %1922 = vmatprep.subr.mxu0 0.0
    %1923 = vmatpush1.msra.mxu0 %v1909
    %1924 = vmatprep.subr.mxu0 0.0
    %1925 = vmatpush1.msra.mxu0 %v1910
    %1926 = vmatprep.subr.mxu0 0.0
    %1927 = vmatpush1.msra.mxu0 0.0
    %1928 = vmatprep.subr.mxu0 0.0
    %1929 = vmatpush1.msra.mxu0 0.0
    %1930 = vmatprep.subr.mxu0 0.0
    %1931 = vmatpush1.msra.mxu0 0.0
    %1932 = vmatprep.subr.mxu0 0.0
    %1933 = vmatpush1.msra.mxu0 0.0
    %1934 = vmatprep.subr.mxu0 0.0
    %1935 = vmatpush1.msra.mxu0 0.0
    %1936 = vmatprep.subr.mxu0 0.0
    %1937 = vmatpush1.msra.mxu0 0.0
    %1938 = vmatprep.subr.mxu0 0.0
    %1939 = vmatpush1.msra.mxu0 0.0
    %1940 = vmatprep.subr.mxu0 0.0
    %1941 = vmatpush1.msra.mxu0 0.0
    %1942 = vmatprep.subr.mxu0 0.0
    %1943 = vmatpush1.msra.mxu0 0.0
    %1944 = vmatprep.subr.mxu0 0.0
    %1945 = vmatpush1.msra.mxu0 0.0
    %1946 = vmatprep.subr.mxu0 0.0
    %1947 = vmatpush1.msra.mxu0 0.0
    %1948 = vmatprep.subr.mxu0 0.0
    %1949 = vmatpush1.msra.mxu0 0.0
    %1950 = vmatprep.subr.mxu0 0.0
    %1951 = vmatpush1.msra.mxu0 0.0
    %1952 = vmatprep.subr.mxu0 0.0
    %1953 = vmatpush1.msra.mxu0 0.0
    %1954 = vmatprep.subr.mxu0 0.0
    %1955 = vmatpush1.msra.mxu0 0.0
    %1956 = vmatprep.subr.mxu0 0.0
    %1957 = vmatpush1.msra.mxu0 0.0
    %1958 = vmatprep.subr.mxu0 0.0
    %1959 = vmatpush1.msra.mxu0 0.0
    %1960 = vmatprep.subr.mxu0 0.0
    %1961 = vmatpush1.msra.mxu0 0.0
    %1962 = vmatprep.subr.mxu0 0.0
    %1963 = vmatpush1.msra.mxu0 0.0
    %1964 = vmatprep.subr.mxu0 0.0
    %1965 = vmatpush1.msra.mxu0 0.0
    %1966 = vmatprep.subr.mxu0 0.0
    %1967 = vmatpush1.msra.mxu0 0.0
    %1968 = vmatprep.subr.mxu0 0.0
    %1969 = vmatpush1.msra.mxu0 0.0
    %1970 = vmatprep.subr.mxu0 0.0
    %1971 = vmatpush1.msra.mxu0 0.0
    %1972 = vmatprep.subr.mxu0 0.0
    %1973 = vmatpush1.msra.mxu0 0.0
    %1974 = vmatprep.subr.mxu0 0.0
    %1975 = vmatpush1.msra.mxu0 0.0
    %1976 = vmatprep.subr.mxu0 0.0
    %1977 = vmatpush1.msra.mxu0 0.0
    %1978 = vmatprep.subr.mxu0 0.0
    %1979 = vmatpush1.msra.mxu0 0.0
    %1980 = vmatprep.subr.mxu0 0.0
    %1981 = vmatpush1.msra.mxu0 0.0
    %1982 = vmatprep.mubr.f32.mxu0 0.0
    %1983 = vmatmul.mubr.f32.gmra.mrb[0].mxu0 %v664
    %v1984 = vpop.f32.mrb[0].mxu0
    %v1985 = vadd.f32 %v1916, %v1984
    %v1986 = vpop.f32.mrb[0].mxu0
    %1987 = vdwg.mxu0
    %v1988 = vtanh.pop %v1985
    %v1991 = vunpack.c.l.s4 1966171168
    %v1992 = vunpack.c.0.s8 %v1991
    %v1993 = vlaneseq
    %v1994 = vshrl.u32 %v1993, 7
    %v1995 = vsub.s32 %v1992, %v1994
    %v1996 = vrot.slane %v1988, %v1995
    %v1997 = vcombine.high %v1996, %v1996
    %v1999 = vunpack.c.l.s4 1966171168
    %v2000 = vunpack.c.0.s8 %v1999
    %v2001 = vlaneseq
    %v2002 = vshrl.u32 %v2001, 7
    %v2003 = vsub.s32 %v2000, %v2002
    %v2004 = vrot.slane %v1996, %v2003
    %v2006 = vunpack.c.l.s4 1966171168
    %v2007 = vunpack.c.0.s8 %v2006
    %v2008 = vlaneseq
    %v2009 = vshrl.u32 %v2008, 7
    %v2010 = vsub.s32 %v2007, %v2009
    %v2011 = vrot.slane %v1997, %v2010
    %v2012 = vlaneseq
    %v2013 = vshrl.u32 %v2012, 7
    %v2014 = vsub.s32 0, %v2013
    %v2015 = vrot.slane %v2004, %v2014
    %v2016 = vlaneseq
    %v2017 = vshrl.u32 %v2016, 7
    %v2018 = vsub.s32 0, %v2017
    %v2019 = vrot.slane %v2011, %v2018
    %v2022 = vmul.f32 %v1905, %v2015
    %v2023 = vmul.f32 %v1906, %v2019
    %v2024 = vsel %vm214, %v2022, 0.0
    %2025 = vadd.xlane.f32.xlu0 %v2024
    %v2026 = vpop.xlane.xlu0 %2025
    %v2027 = vsel %vm214, %v2023, 0.0
    %2028 = vadd.xlane.f32.xlu0 %v2027
    %v2029 = vpop.xlane.xlu0 %2028
    %v2030 = vadd.f32 %v2026, %v1026
    %v2031 = vadd.f32 %v2029, %v1027
    %vm2032 = vcmask 7168
    %v2033 = vsel %vm2032, %v2030, -inf
    %v2034 = vrot.slane %v2033, 4
    %v2035 = vmax.f32 %v2033, %v2034
    %v2036 = vrot.slane %v2035, 2
    %v2037 = vmax.f32 %v2035, %v2036
    %v2038 = vrot.slane %v2037, 1
    %v2039 = vmax.f32 %v2037, %v2038
    %v2040 = vsel %vm2032, %v2031, -inf
    %v2041 = vrot.slane %v2040, 4
    %v2042 = vmax.f32 %v2040, %v2041
    %v2043 = vrot.slane %v2042, 2
    %v2044 = vmax.f32 %v2042, %v2043
    %v2045 = vrot.slane %v2044, 1
    %v2046 = vmax.f32 %v2044, %v2045
    %v2047 = vsub.f32 %v2030, %v2039
    %v2048 = vsub.f32 %v2031, %v2046
    %v2049 = vmul.f32 %v2047, 1.442695
    %v2050 = vpow.pop %v2049
    %v2051 = vmul.f32 %v2048, 1.442695
    %v2052 = vpow.pop %v2051
    %v2053 = vsel %vm2032, %v2050, 0.0
    %v2054 = vrot.slane %v2053, 4
    %v2055 = vadd.f32 %v2053, %v2054
    %v2056 = vrot.slane %v2055, 2
    %v2057 = vadd.f32 %v2055, %v2056
    %v2058 = vrot.slane %v2057, 1
    %v2059 = vadd.f32 %v2057, %v2058
    %v2060 = vsel %vm2032, %v2052, 0.0
    %v2061 = vrot.slane %v2060, 4
    %v2062 = vadd.f32 %v2060, %v2061
    %v2063 = vrot.slane %v2062, 2
    %v2064 = vadd.f32 %v2062, %v2063
    %v2065 = vrot.slane %v2064, 1
    %v2066 = vadd.f32 %v2064, %v2065
    %v2067 = vrcp.pop %v2059
    %v2068 = vrcp.pop %v2066
    %v2069 = vmul.f32 %v2050, %v2067
    %v2070 = vmul.f32 %v2052, %v2068
    %2072 = vset.pattern.permute.xlu0 0
    %2073 = vperm.xlu0 %2072, %v2069
    %v2074 = vpop.permute.xlu0 %2073
    %2077 = vset.pattern.permute.xlu0 0
    %2078 = vperm.xlu0 %2077, %v2070
    %v2079 = vpop.permute.xlu0 %2078
    %v2083 = vmul.f32 %v2074, %v1818
    %v2084 = vmul.f32 %v2079, %v1825
    %v2085 = vsel %vm214, %v2083, 0.0
    %v2086 = vrot.slane %v2085, 4
    %v2087 = vadd.f32 %v2085, %v2086
    %v2088 = vrot.slane %v2087, 2
    %v2089 = vadd.f32 %v2087, %v2088
    %v2090 = vrot.slane %v2089, 1
    %v2091 = vadd.f32 %v2089, %v2090
    %v2092 = vsel %vm214, %v2084, 0.0
    %v2093 = vrot.slane %v2092, 4
    %v2094 = vadd.f32 %v2092, %v2093
    %v2095 = vrot.slane %v2094, 2
    %v2096 = vadd.f32 %v2094, %v2095
    %v2097 = vrot.slane %v2096, 1
    %v2098 = vadd.f32 %v2096, %v2097
    %v2099 = vld [vmem:[%s53] sm:$0xff]
    %v2100 = vld [vmem:[%s53 + $0x8] sm:$0xff]
    %v2101 = vld [vmem:[%s53 + $0x10] sm:$0xff]
    %v2102 = vld [vmem:[%s53 + $0x18] sm:$0xff]
    %v2103 = vld [vmem:[%s55] sm:$0x1]
    %v2105 = vlaneseq
    %v2106 = vshrl.u32 %v2105, 7
    %v2107 = vsub.s32 0, %v2106
    %v2108 = vrot.slane %v2103, %v2107
    %v2112 = vsel %vm1805, %v2098, %v2091
    %v2113 = vsel %vm214, %v2112, 0
    %2115 = vmatprep.subr.mxu0 0.0
    %2116 = vmatpush1.msra.mxu0 %v2099
    %2117 = vmatprep.subr.mxu0 0.0
    %2118 = vmatpush1.msra.mxu0 %v2100
    %2119 = vmatprep.subr.mxu0 0.0
    %2120 = vmatpush1.msra.mxu0 %v2101
    %2121 = vmatprep.subr.mxu0 0.0
    %2122 = vmatpush1.msra.mxu0 %v2102
    %2123 = vmatprep.subr.mxu0 0.0
    %2124 = vmatpush1.msra.mxu0 0.0
    %2125 = vmatprep.subr.mxu0 0.0
    %2126 = vmatpush1.msra.mxu0 0.0
    %2127 = vmatprep.subr.mxu0 0.0
    %2128 = vmatpush1.msra.mxu0 0.0
    %2129 = vmatprep.subr.mxu0 0.0
    %2130 = vmatpush1.msra.mxu0 0.0
    %2131 = vmatprep.subr.mxu0 0.0
    %2132 = vmatpush1.msra.mxu0 0.0
    %2133 = vmatprep.subr.mxu0 0.0
    %2134 = vmatpush1.msra.mxu0 0.0
    %2135 = vmatprep.subr.mxu0 0.0
    %2136 = vmatpush1.msra.mxu0 0.0
    %2137 = vmatprep.subr.mxu0 0.0
    %2138 = vmatpush1.msra.mxu0 0.0
    %2139 = vmatprep.subr.mxu0 0.0
    %2140 = vmatpush1.msra.mxu0 0.0
    %2141 = vmatprep.subr.mxu0 0.0
    %2142 = vmatpush1.msra.mxu0 0.0
    %2143 = vmatprep.subr.mxu0 0.0
    %2144 = vmatpush1.msra.mxu0 0.0
    %2145 = vmatprep.subr.mxu0 0.0
    %2146 = vmatpush1.msra.mxu0 0.0
    %2147 = vmatprep.subr.mxu0 0.0
    %2148 = vmatpush1.msra.mxu0 0.0
    %2149 = vmatprep.subr.mxu0 0.0
    %2150 = vmatpush1.msra.mxu0 0.0
    %2151 = vmatprep.subr.mxu0 0.0
    %2152 = vmatpush1.msra.mxu0 0.0
    %2153 = vmatprep.subr.mxu0 0.0
    %2154 = vmatpush1.msra.mxu0 0.0
    %2155 = vmatprep.subr.mxu0 0.0
    %2156 = vmatpush1.msra.mxu0 0.0
    %2157 = vmatprep.subr.mxu0 0.0
    %2158 = vmatpush1.msra.mxu0 0.0
    %2159 = vmatprep.subr.mxu0 0.0
    %2160 = vmatpush1.msra.mxu0 0.0
    %2161 = vmatprep.subr.mxu0 0.0
    %2162 = vmatpush1.msra.mxu0 0.0
    %2163 = vmatprep.subr.mxu0 0.0
    %2164 = vmatpush1.msra.mxu0 0.0
    %2165 = vmatprep.subr.mxu0 0.0
    %2166 = vmatpush1.msra.mxu0 0.0
    %2167 = vmatprep.subr.mxu0 0.0
    %2168 = vmatpush1.msra.mxu0 0.0
    %2169 = vmatprep.subr.mxu0 0.0
    %2170 = vmatpush1.msra.mxu0 0.0
    %2171 = vmatprep.subr.mxu0 0.0
    %2172 = vmatpush1.msra.mxu0 0.0
    %2173 = vmatprep.subr.mxu0 0.0
    %2174 = vmatpush1.msra.mxu0 0.0
    %2175 = vmatprep.subr.mxu0 0.0
    %2176 = vmatpush1.msra.mxu0 0.0
    %2177 = vmatprep.subr.mxu0 0.0
    %2178 = vmatpush1.msra.mxu0 0.0
    %2179 = vmatprep.mubr.f32.mxu0 0.0
    %2180 = vmatmul.mubr.f32.gmra.mrb[0].mxu0 %v2113
    %v2181 = vpop.f32.mrb[0].mxu0
    %v2182 = vadd.f32 %v2108, %v2181
    %v2183 = vpop.f32.mrb[0].mxu0
    %2184 = vdwg.mxu0
    %v2185 = vld [vmem:[#allocation9] sm:$0xff]
    %v2186 = vld [vmem:[#allocation9 + $0x8] sm:$0xff]
    %v2187 = vld [vmem:[#allocation9 + $0x10] sm:$0xff]
    %v2188 = vld [vmem:[#allocation9 + $0x18] sm:$0xff]
    %2189 = vmatprep.subr.mxu0 0.0
    %2190 = vmatpush1.msra.mxu0 %v2185
    %2191 = vmatprep.subr.mxu0 0.0
    %2192 = vmatpush1.msra.mxu0 %v2186
    %2193 = vmatprep.subr.mxu0 0.0
    %2194 = vmatpush1.msra.mxu0 %v2187
    %2195 = vmatprep.subr.mxu0 0.0
    %2196 = vmatpush1.msra.mxu0 %v2188
    %2197 = vmatprep.subr.mxu0 0.0
    %2198 = vmatpush1.msra.mxu0 0.0
    %2199 = vmatprep.subr.mxu0 0.0
    %2200 = vmatpush1.msra.mxu0 0.0
    %2201 = vmatprep.subr.mxu0 0.0
    %2202 = vmatpush1.msra.mxu0 0.0
    %2203 = vmatprep.subr.mxu0 0.0
    %2204 = vmatpush1.msra.mxu0 0.0
    %2205 = vmatprep.subr.mxu0 0.0
    %2206 = vmatpush1.msra.mxu0 0.0
    %2207 = vmatprep.subr.mxu0 0.0
    %2208 = vmatpush1.msra.mxu0 0.0
    %2209 = vmatprep.subr.mxu0 0.0
    %2210 = vmatpush1.msra.mxu0 0.0
    %2211 = vmatprep.subr.mxu0 0.0
    %2212 = vmatpush1.msra.mxu0 0.0
    %2213 = vmatprep.subr.mxu0 0.0
    %2214 = vmatpush1.msra.mxu0 0.0
    %2215 = vmatprep.subr.mxu0 0.0
    %2216 = vmatpush1.msra.mxu0 0.0
    %2217 = vmatprep.subr.mxu0 0.0
    %2218 = vmatpush1.msra.mxu0 0.0
    %2219 = vmatprep.subr.mxu0 0.0
    %2220 = vmatpush1.msra.mxu0 0.0
    %2221 = vmatprep.subr.mxu0 0.0
    %2222 = vmatpush1.msra.mxu0 0.0
    %2223 = vmatprep.subr.mxu0 0.0
    %2224 = vmatpush1.msra.mxu0 0.0
    %2225 = vmatprep.subr.mxu0 0.0
    %2226 = vmatpush1.msra.mxu0 0.0
    %2227 = vmatprep.subr.mxu0 0.0
    %2228 = vmatpush1.msra.mxu0 0.0
    %2229 = vmatprep.subr.mxu0 0.0
    %2230 = vmatpush1.msra.mxu0 0.0
    %2231 = vmatprep.subr.mxu0 0.0
    %2232 = vmatpush1.msra.mxu0 0.0
    %2233 = vmatprep.subr.mxu0 0.0
    %2234 = vmatpush1.msra.mxu0 0.0
    %2235 = vmatprep.subr.mxu0 0.0
    %2236 = vmatpush1.msra.mxu0 0.0
    %2237 = vmatprep.subr.mxu0 0.0
    %2238 = vmatpush1.msra.mxu0 0.0
    %2239 = vmatprep.subr.mxu0 0.0
    %2240 = vmatpush1.msra.mxu0 0.0
    %2241 = vmatprep.subr.mxu0 0.0
    %2242 = vmatpush1.msra.mxu0 0.0
    %2243 = vmatprep.subr.mxu0 0.0
    %2244 = vmatpush1.msra.mxu0 0.0
    %2245 = vmatprep.subr.mxu0 0.0
    %2246 = vmatpush1.msra.mxu0 0.0
    %2247 = vmatprep.subr.mxu0 0.0
    %2248 = vmatpush1.msra.mxu0 0.0
    %2249 = vmatprep.subr.mxu0 0.0
    %2250 = vmatpush1.msra.mxu0 0.0
    %2251 = vmatprep.subr.mxu0 0.0
    %2252 = vmatpush1.msra.mxu0 0.0
    %2253 = vmatprep.mubr.f32.mxu0 0.0
    %2254 = vmatmul.mubr.f32.gmra.mrb[0].mxu0 %v664
    %v2255 = vpop.f32.mrb[0].mxu0
    %v2256 = vadd.f32 0.0, %v2255
    %v2257 = vpop.f32.mrb[0].mxu0
    %2258 = vdwg.mxu0
    %v2259 = vadd.f32 %v2182, %v2256
    %v2260 = vld [vmem:[%s59] sm:$0x1]
    %v2262 = vlaneseq
    %v2263 = vshrl.u32 %v2262, 7
    %v2264 = vsub.s32 0, %v2263
    %v2265 = vrot.slane %v2260, %v2264
    %v2267 = vadd.f32 %v2259, %v2265
    %v2268 = vsub.f32 0.0, %v2267
    %v2269 = vmul.f32 %v2268, 1.442695
    %v2270 = vpow.pop %v2269
    %v2271 = vadd.f32 %v2270, 1.0
    %v2272 = vrcp.pop %v2271
    %v2274 = vmul.f32 %v2272, %v2112
    %v2275 = vsub.f32 1.0, %v2272
    %v2276 = vmul.f32 %v2275, %v651
    %v2277 = vadd.f32 %v2274, %v2276
    %v2278 = vld [vmem:[%s61] sm:$0xff]
    %v2279 = vld [vmem:[%s61 + $0x8] sm:$0xff]
    %v2280 = vld [vmem:[%s61 + $0x10] sm:$0xff]
    %v2281 = vld [vmem:[%s61 + $0x18] sm:$0xff]
    %v2282 = vld [vmem:[%s63] sm:$0x1]
    %v2284 = vlaneseq
    %v2285 = vshrl.u32 %v2284, 7
    %v2286 = vsub.s32 0, %v2285
    %v2287 = vrot.slane %v2282, %v2286
    %v2290 = vsel %vm214, %v2277, 0
    %2292 = vmatprep.subr.mxu0 0.0
    %2293 = vmatpush1.msra.mxu0 %v2278
    %2294 = vmatprep.subr.mxu0 0.0
    %2295 = vmatpush1.msra.mxu0 %v2279
    %2296 = vmatprep.subr.mxu0 0.0
    %2297 = vmatpush1.msra.mxu0 %v2280
    %2298 = vmatprep.subr.mxu0 0.0
    %2299 = vmatpush1.msra.mxu0 %v2281
    %2300 = vmatprep.subr.mxu0 0.0
    %2301 = vmatpush1.msra.mxu0 0.0
    %2302 = vmatprep.subr.mxu0 0.0
    %2303 = vmatpush1.msra.mxu0 0.0
    %2304 = vmatprep.subr.mxu0 0.0
    %2305 = vmatpush1.msra.mxu0 0.0
    %2306 = vmatprep.subr.mxu0 0.0
    %2307 = vmatpush1.msra.mxu0 0.0
    %2308 = vmatprep.subr.mxu0 0.0
    %2309 = vmatpush1.msra.mxu0 0.0
    %2310 = vmatprep.subr.mxu0 0.0
    %2311 = vmatpush1.msra.mxu0 0.0
    %2312 = vmatprep.subr.mxu0 0.0
    %2313 = vmatpush1.msra.mxu0 0.0
    %2314 = vmatprep.subr.mxu0 0.0
    %2315 = vmatpush1.msra.mxu0 0.0
    %2316 = vmatprep.subr.mxu0 0.0
    %2317 = vmatpush1.msra.mxu0 0.0
    %2318 = vmatprep.subr.mxu0 0.0
    %2319 = vmatpush1.msra.mxu0 0.0
    %2320 = vmatprep.subr.mxu0 0.0
    %2321 = vmatpush1.msra.mxu0 0.0
    %2322 = vmatprep.subr.mxu0 0.0
    %2323 = vmatpush1.msra.mxu0 0.0
    %2324 = vmatprep.subr.mxu0 0.0
    %2325 = vmatpush1.msra.mxu0 0.0
    %2326 = vmatprep.subr.mxu0 0.0
    %2327 = vmatpush1.msra.mxu0 0.0
    %2328 = vmatprep.subr.mxu0 0.0
    %2329 = vmatpush1.msra.mxu0 0.0
    %2330 = vmatprep.subr.mxu0 0.0
    %2331 = vmatpush1.msra.mxu0 0.0
    %2332 = vmatprep.subr.mxu0 0.0
    %2333 = vmatpush1.msra.mxu0 0.0
    %2334 = vmatprep.subr.mxu0 0.0
    %2335 = vmatpush1.msra.mxu0 0.0
    %2336 = vmatprep.subr.mxu0 0.0
    %2337 = vmatpush1.msra.mxu0 0.0
    %2338 = vmatprep.subr.mxu0 0.0
    %2339 = vmatpush1.msra.mxu0 0.0
    %2340 = vmatprep.subr.mxu0 0.0
    %2341 = vmatpush1.msra.mxu0 0.0
    %2342 = vmatprep.subr.mxu0 0.0
    %2343 = vmatpush1.msra.mxu0 0.0
    %2344 = vmatprep.subr.mxu0 0.0
    %2345 = vmatpush1.msra.mxu0 0.0
    %2346 = vmatprep.subr.mxu0 0.0
    %2347 = vmatpush1.msra.mxu0 0.0
    %2348 = vmatprep.subr.mxu0 0.0
    %2349 = vmatpush1.msra.mxu0 0.0
    %2350 = vmatprep.subr.mxu0 0.0
    %2351 = vmatpush1.msra.mxu0 0.0
    %2352 = vmatprep.subr.mxu0 0.0
    %2353 = vmatpush1.msra.mxu0 0.0
    %2354 = vmatprep.subr.mxu0 0.0
    %2355 = vmatpush1.msra.mxu0 0.0
    %2356 = vmatprep.mubr.f32.mxu0 0.0
    %2357 = vmatmul.mubr.f32.gmra.mrb[0].mxu0 %v2290
    %v2358 = vpop.f32.mrb[0].mxu0
    %v2359 = vadd.f32 %v2287, %v2358
    %v2360 = vpop.f32.mrb[0].mxu0
    %2361 = vdwg.mxu0
    %vm2362 = vcmask 58368
    %v2363 = vsel %vm2362, %v2359, -inf
    %2364 = vmax.xlane.f32.xlu0 %v2363
    %v2365 = vpop.xlane.xlu0 %2364
    %v2366 = vsub.f32 %v2359, %v2365
    %v2367 = vmul.f32 %v2366, 1.442695
    %v2368 = vpow.pop %v2367
    %v2369 = vsel %vm2362, %v2368, 0.0
    %2370 = vadd.xlane.f32.xlu0 %v2369
    %v2371 = vpop.xlane.xlu0 %2370
    %v2372 = vlog2.pop %v2371
    %v2373 = vmul.f32 %v2372, 0.6931472
    %v2374 = vsub.f32 %v2366, %v2373
    %2375 = vst [vmem:[%s65] sm:$0x3] 0.0
    %2376 = vst.msk [vmem:[%s65] sm:$0x3] %vm737, %v748
    %2378 = vrot.lane.b32.xlu0 %v2374, 32
    %v2379 = vpop.permute.xlu0 %2378
    %vm2381 = vcmask 320768
    %2382 = vst.msk [vmem:[%s65] sm:$0x3] %vm2381, %v2379
    // Predicated region
    $region150: #{tesan_forward.1} parent=1 // pred_check
      _
    $region151: #{tesan_forward.1} parent=1 // pred_check_branch
      %2384 = sbr.rel (0) target = $region153
    $region152: #{tesan_forward.1} parent=1 // pred_region
      _
    $region153: #{tesan_forward.1} parent=1 // pred_fallthru
      _
    // Predicated region
    $region154: #{tesan_forward.1} parent=1 // pred_check
      _
    $region155: #{tesan_forward.1} parent=1 // pred_check_branch
      %2386 = sbr.rel (0) target = $region157
    $region156: #{tesan_forward.1} parent=1 // pred_region
      _
    $region157: #{tesan_forward.1} parent=1 // pred_fallthru
      _
    %2387 = vsyncpa [#allocation3], 1
    %2388 = vsyncpa [#allocation5], 1
    %2389 = vsyncpa [#allocation8], 1

</llo_original>
